<compile_context>
chip_gen: v5e
topology: v5e:2x2
jax: 0.10.0
libtpu: 0.0.40
codegen_flags: <defaults>
</compile_context>

<pallas_src>
import functools

import jax
import jax.numpy as jnp
from jax import lax
from jax.experimental import pallas as pl
from jax.experimental.pallas import tpu as pltpu


FC_OUT = 7        # nn.Linear(hidden_size, 7)
FC_OUT_PAD = 128  # pad fc output lanes so the kernel's store is lane-dense


# ----------------------------------------------------------------------------
# Fused kernel: num_layers LSTM layers (wavefront) + fc head in one pallas_call.
# ----------------------------------------------------------------------------
def _fused_lstm_kernel(*refs, num_layers, seq_len, batch_pad, batch_idx,
                       hidden, compute_dtype):
    """refs layout (inputs, outputs, scratch, in order):

      x_ref                      (T*Bp, D_in)      f32   (batch padded to Bp)
      [w_ih_t, w_hh_t, b] * L    (D_l,4H),(H,4H),(1,4H)  (weights compute_dtype,
                                                          bias f32)
      fc_w_ref                   (H, FC_OUT_PAD)   compute_dtype
      fc_b_ref                   (1, FC_OUT_PAD)   f32
      out_ref                    (T, FC_OUT_PAD)   f32
      pre_scr                    (T*Bp, 4H)        f32   layer-0 pre-gates
      hout_scr                   (T, Bp, H)        f32   last-layer h outputs
    """
    T, Bp, H, L = seq_len, batch_pad, hidden, num_layers
    x_ref = refs[0]
    layer_refs = [tuple(refs[1 + 3 * l: 1 + 3 * (l + 1)]) for l in range(L)]
    fc_w_ref = refs[1 + 3 * L]
    fc_b_ref = refs[2 + 3 * L]
    out_ref = refs[3 + 3 * L]
    pre_scr, hout_scr = refs[4 + 3 * L:]

    # Hoisted layer-0 input projection for ALL timesteps: one tall MXU matmul
    # + combined bias, off the serial recurrence critical path.
    w_ih0_ref, _, b0_ref = layer_refs[0]
    pre_scr[...] = (
        jnp.dot(x_ref[...].astype(compute_dtype), w_ih0_ref[...],
                preferred_element_type=jnp.float32)
        + b0_ref[...]
    )

    zero = jnp.zeros((Bp, H), jnp.float32)
    h = [zero] * L
    c = [zero] * L

    # Wavefront over (layer, timestep): at wave step s, layer l handles
    # t = s - l.  Layer l reads h[l-1] as left by the PREVIOUS wave step
    # (its output for the same timestep t), so adjacent-layer steps inside
    # one wave step are independent and can be interleaved by the scheduler.
    for s in range(T + L - 1):
        new_h = list(h)
        new_c = list(c)
        for l in range(L):
            t = s - l
            if not (0 <= t < T):
                continue
            w_ih_ref, w_hh_ref, b_ref = layer_refs[l]

            if l == 0:
                # Aligned (Bp, 4H) slab: t*Bp is a static multiple of 8.
                pre = pre_scr[t * Bp:(t + 1) * Bp, :]
            else:
                # Per-step input projection from the previous layer's h_t
                # (independent MXU work that overlaps layer l-1's next step).
                pre = (
                    jnp.dot(h[l - 1].astype(compute_dtype), w_ih_ref[...],
                            preferred_element_type=jnp.float32)
                    + b_ref[...]
                )

            gates = pre + jnp.dot(h[l].astype(compute_dtype), w_hh_ref[...],
                                  preferred_element_type=jnp.float32)

            # Full-width nonlinearities (2 EUP chains over the whole (Bp, 4H)
            # vreg), then lane slices for i, f, g, o (PyTorch gate order).
            sg = jax.nn.sigmoid(gates)
            th = jnp.tanh(gates)
            i = sg[:, 0 * H:1 * H]
            f = sg[:, 1 * H:2 * H]
            g = th[:, 2 * H:3 * H]
            o = sg[:, 3 * H:4 * H]

            c_new = f * c[l] + i * g
            h_new = o * jnp.tanh(c_new)
            new_h[l], new_c[l] = h_new, c_new

            if l == L - 1:
                # Full aligned (Bp, H) tile store; not on the dependency chain.
                hout_scr[t] = h_new
        h, c = new_h, new_c

    # Extract the last batch element's hidden sequence once, then fused fc
    # head: (T, H) @ (H, FC_OUT_PAD) -> single lane-dense (T, 128) store.
    last = hout_scr[...][:, batch_idx, :]
    out_ref[...] = (
        jnp.dot(last.astype(compute_dtype), fc_w_ref[...],
                preferred_element_type=jnp.float32)
        + fc_b_ref[...]
    )


# ----------------------------------------------------------------------------
# Wrapper: pads batch to the sublane tile and fc head to 128 lanes, calls the
# fused kernel.
# ----------------------------------------------------------------------------
def lstm_module_forward(x, params, *, compute_dtype=jnp.bfloat16):
    """x: (T, B, input_size) f32.  Returns (T, 7), matching the PyTorch module."""
    T, B, D_in = x.shape
    layers = params["lstm_layers"]
    L = len(layers)
    H = layers[0][1].shape[0]

    # Pad batch to the 8-sublane tile so all per-step slabs are aligned tiles.
    Bp = max(8, ((B + 7) // 8) * 8)
    x_pad = jnp.zeros((T, Bp, D_in), jnp.float32).at[:, :B, :].set(x)
    x_flat = x_pad.reshape(T * Bp, D_in)

    flat_inputs = [x_flat]
    in_specs = [pl.BlockSpec((T * Bp, D_in), lambda i: (0, 0))]
    for (w_ih_t, w_hh_t, b) in layers:
        d_l = w_ih_t.shape[0]
        flat_inputs += [w_ih_t.astype(compute_dtype),
                        w_hh_t.astype(compute_dtype),
                        b]
        in_specs += [
            pl.BlockSpec((d_l, 4 * H), lambda i: (0, 0)),
            pl.BlockSpec((H, 4 * H), lambda i: (0, 0)),
            pl.BlockSpec((1, 4 * H), lambda i: (0, 0)),
        ]

    fc_w_pad = jnp.zeros((H, FC_OUT_PAD), compute_dtype).at[:, :FC_OUT].set(
        params["fc_w_t"].astype(compute_dtype))
    fc_b_pad = jnp.zeros((1, FC_OUT_PAD), jnp.float32).at[:, :FC_OUT].set(
        params["fc_b"])
    flat_inputs += [fc_w_pad, fc_b_pad]
    in_specs += [pl.BlockSpec((H, FC_OUT_PAD), lambda i: (0, 0)),
                 pl.BlockSpec((1, FC_OUT_PAD), lambda i: (0, 0))]

    kernel = functools.partial(
        _fused_lstm_kernel, num_layers=L, seq_len=T, batch_pad=Bp,
        batch_idx=B - 1, hidden=H, compute_dtype=compute_dtype)

    out_pad = pl.pallas_call(
        kernel,
        out_shape=jax.ShapeDtypeStruct((T, FC_OUT_PAD), jnp.float32),
        grid_spec=pltpu.PrefetchScalarGridSpec(
            num_scalar_prefetch=0,
            grid=(1,),
            in_specs=in_specs,
            out_specs=pl.BlockSpec((T, FC_OUT_PAD), lambda i: (0, 0)),
            scratch_shapes=[
                pltpu.VMEM((T * Bp, 4 * H), jnp.float32),  # layer-0 pre-gates
                pltpu.VMEM((T, Bp, H), jnp.float32),       # last-layer h outputs
            ],
        ),
        compiler_params=pltpu.CompilerParams(
            dimension_semantics=("arbitrary",),
            vmem_limit_bytes=32 * 1024 * 1024,  # explicit budget (v7x-safe)
        ),
    )(*flat_inputs)

    return out_pad[:, :FC_OUT]


# ----------------------------------------------------------------------------
# Parameters (mimics PyTorch U(-1/sqrt(H), 1/sqrt(H)) init; weights pre-transposed).
# ----------------------------------------------------------------------------
def init_params(key, input_size, hidden_size, num_layers, out_features=FC_OUT):
    params = {"lstm_layers": []}
    bound = 1.0 / jnp.sqrt(jnp.float32(hidden_size))
    for layer in range(num_layers):
        d_in = input_size if layer == 0 else hidden_size
        key, k1, k2, k3, k4 = jax.random.split(key, 5)
        w_ih = jax.random.uniform(k1, (4 * hidden_size, d_in), jnp.float32, -bound, bound)
        w_hh = jax.random.uniform(k2, (4 * hidden_size, hidden_size), jnp.float32, -bound, bound)
        b_ih = jax.random.uniform(k3, (4 * hidden_size,), jnp.float32, -bound, bound)
        b_hh = jax.random.uniform(k4, (4 * hidden_size,), jnp.float32, -bound, bound)
        params["lstm_layers"].append(
            (w_ih.T, w_hh.T, (b_ih + b_hh).reshape(1, 4 * hidden_size))
        )
    key, k5, k6 = jax.random.split(key, 3)
    fc_w = jax.random.uniform(k5, (out_features, hidden_size), jnp.float32, -bound, bound)
    fc_b = jax.random.uniform(k6, (out_features,), jnp.float32, -bound, bound)
    params["fc_w_t"] = fc_w.T
    params["fc_b"] = fc_b.reshape(1, out_features)
    return params


# ----------------------------------------------------------------------------
# Pure-JAX reference (for correctness check against the Pallas kernel).
# ----------------------------------------------------------------------------
def _ref_forward(x, params):
    h_seq = x
    for (w_ih_t, w_hh_t, b) in params["lstm_layers"]:
        H = w_hh_t.shape[0]
        B = h_seq.shape[1]

        def step(carry, x_t):
            h, c = carry
            gates = x_t @ w_ih_t + h @ w_hh_t + b
            i = jax.nn.sigmoid(gates[:, 0 * H:1 * H])
            f = jax.nn.sigmoid(gates[:, 1 * H:2 * H])
            g = jnp.tanh(gates[:, 2 * H:3 * H])
            o = jax.nn.sigmoid(gates[:, 3 * H:4 * H])
            c = f * c + i * g
            h = o * jnp.tanh(c)
            return (h, c), h

        init = (jnp.zeros((B, H), jnp.float32), jnp.zeros((B, H), jnp.float32))
        _, h_seq = lax.scan(step, init, h_seq)
    last = h_seq[:, -1, :]
    return last @ params["fc_w_t"] + params["fc_b"]


if __name__ == "__main__":
    input_size = 16
    hidden_size = 32
    num_layers = 2
    T, B = 8, 2  # seq-first layout: (T, B, input_size)

    key = jax.random.PRNGKey(0)
    key, kx = jax.random.split(key)
    x = jax.random.normal(kx, (T, B, input_size), dtype=jnp.float32)
    params = init_params(key, input_size, hidden_size, num_layers)

    ref = _ref_forward(x, params)

    # Default path: bf16 MXU operands (fast MXU + half the weight bytes on all
    # generations); gate/elementwise math and c/h state stay f32.
    out = jax.block_until_ready(lstm_module_forward(x, params))
    assert out.shape == (T, FC_OUT), out.shape
    assert jnp.allclose(out, ref, atol=1e-1, rtol=1e-1), "bf16 mismatch vs reference"

    # f32 MXU operands: bit-exactness mode vs. the module semantics.
    out_f32 = jax.block_until_ready(
        lstm_module_forward(x, params, compute_dtype=jnp.float32))
    assert out_f32.shape == (T, FC_OUT), out_f32.shape
    assert jnp.allclose(out_f32, ref, atol=1e-4, rtol=1e-4), "f32 mismatch vs reference"

    print("KERNEL_OK")
</pallas_src>

<mosaic_0001>
module attributes {stable_mosaic.version = 11 : i64} {
  func.func @_fused_lstm_kernel(%arg0: i32, %arg1: memref<64x16xf32, #tpu.memory_space<vmem>>, %arg2: memref<16x128xbf16, #tpu.memory_space<vmem>>, %arg3: memref<32x128xbf16, #tpu.memory_space<vmem>>, %arg4: memref<1x128xf32, #tpu.memory_space<vmem>>, %arg5: memref<32x128xbf16, #tpu.memory_space<vmem>>, %arg6: memref<32x128xbf16, #tpu.memory_space<vmem>>, %arg7: memref<1x128xf32, #tpu.memory_space<vmem>>, %arg8: memref<32x128xbf16, #tpu.memory_space<vmem>>, %arg9: memref<1x128xf32, #tpu.memory_space<vmem>>, %arg10: memref<8x128xf32, #tpu.memory_space<vmem>>, %arg11: memref<64x128xf32, #tpu.memory_space<vmem>>, %arg12: memref<8x8x32xf32, #tpu.memory_space<vmem>>) attributes {dimension_semantics = [#tpu.dimension_semantics<arbitrary>], iteration_bounds = array<i64: 1>, scalar_prefetch = 0 : i64, scratch_operands = 2 : i64, tpu.core_type = #tpu.core_type<tc>, window_params = [{pipeline_mode = #tpu.pipeline_mode<synchronous>, transform_indices = @transform_0, window_bounds = array<i64: 64, 16>}, {pipeline_mode = #tpu.pipeline_mode<synchronous>, transform_indices = @transform_1, window_bounds = array<i64: 16, 128>}, {pipeline_mode = #tpu.pipeline_mode<synchronous>, transform_indices = @transform_2, window_bounds = array<i64: 32, 128>}, {pipeline_mode = #tpu.pipeline_mode<synchronous>, transform_indices = @transform_3, window_bounds = array<i64: 1, 128>}, {pipeline_mode = #tpu.pipeline_mode<synchronous>, transform_indices = @transform_4, window_bounds = array<i64: 32, 128>}, {pipeline_mode = #tpu.pipeline_mode<synchronous>, transform_indices = @transform_5, window_bounds = array<i64: 32, 128>}, {pipeline_mode = #tpu.pipeline_mode<synchronous>, transform_indices = @transform_6, window_bounds = array<i64: 1, 128>}, {pipeline_mode = #tpu.pipeline_mode<synchronous>, transform_indices = @transform_7, window_bounds = array<i64: 32, 128>}, {pipeline_mode = #tpu.pipeline_mode<synchronous>, transform_indices = @transform_8, window_bounds = array<i64: 1, 128>}, {pipeline_mode = #tpu.pipeline_mode<synchronous>, transform_indices = @transform_9, window_bounds = array<i64: 8, 128>}]} {
    %c0 = arith.constant 0 : index
    %c0_0 = arith.constant 0 : index
    %0 = vector.load %arg1[%c0, %c0_0] : memref<64x16xf32, #tpu.memory_space<vmem>>, vector<64x16xf32>
    %1 = arith.truncf %0 : vector<64x16xf32> to vector<64x16xbf16>
    %c0_1 = arith.constant 0 : index
    %c0_2 = arith.constant 0 : index
    %2 = vector.load %arg2[%c0_1, %c0_2] : memref<16x128xbf16, #tpu.memory_space<vmem>>, vector<16x128xbf16>
    %cst = arith.constant dense<0.000000e+00> : vector<64x128xf32>
    %3 = tpu.matmul %1, %2, %cst {dimension_numbers = #tpu.dot_dimension_numbers<[1], [0], [0], [1], [0, 0, 1, 1], [], []>} : vector<64x16xbf16>, vector<16x128xbf16>, vector<64x128xf32> -> vector<64x128xf32>
    %c0_3 = arith.constant 0 : index
    %c0_4 = arith.constant 0 : index
    %4 = vector.load %arg4[%c0_3, %c0_4] : memref<1x128xf32, #tpu.memory_space<vmem>>, vector<1x128xf32>
    %5 = vector.broadcast %4 : vector<1x128xf32> to vector<64x128xf32>
    %6 = arith.addf %3, %5 : vector<64x128xf32>
    %c0_5 = arith.constant 0 : index
    %c0_6 = arith.constant 0 : index
    %7 = vector.load %arg11[%c0_5, %c0_6] : memref<64x128xf32, #tpu.memory_space<vmem>>, vector<64x128xf32>
    tpu.vector_store %arg11[%c0_5, %c0_6], %6 {strides = array<i32>} : memref<64x128xf32, #tpu.memory_space<vmem>>, vector<64x128xf32>,
    %cst_7 = arith.constant 0.000000e+00 : f32
    %8 = vector.broadcast %cst_7 : f32 to vector<8x32xf32>
    %c0_8 = arith.constant 0 : index
    %c0_9 = arith.constant 0 : index
    %9 = vector.load %arg11[%c0_8, %c0_9] : memref<64x128xf32, #tpu.memory_space<vmem>>, vector<8x128xf32>
    %10 = arith.truncf %8 : vector<8x32xf32> to vector<8x32xbf16>
    %c0_10 = arith.constant 0 : index
    %c0_11 = arith.constant 0 : index
    %11 = vector.load %arg3[%c0_10, %c0_11] : memref<32x128xbf16, #tpu.memory_space<vmem>>, vector<32x128xbf16>
    %cst_12 = arith.constant dense<0.000000e+00> : vector<8x128xf32>
    %12 = tpu.matmul %10, %11, %cst_12 {dimension_numbers = #tpu.dot_dimension_numbers<[1], [0], [0], [1], [0, 0, 1, 1], [], []>} : vector<8x32xbf16>, vector<32x128xbf16>, vector<8x128xf32> -> vector<8x128xf32>
    %13 = arith.addf %9, %12 : vector<8x128xf32>
    %14 = arith.negf %13 : vector<8x128xf32>
    %15 = math.exp %14 : vector<8x128xf32>
    %cst_13 = arith.constant 1.000000e+00 : f32
    %16 = vector.broadcast %cst_13 : f32 to vector<8x128xf32>
    %17 = arith.addf %16, %15 : vector<8x128xf32>
    %18 = arith.divf %16, %17 : vector<8x128xf32>
    %19 = math.tanh %13 : vector<8x128xf32>
    %20 = vector.extract_strided_slice %18 {offsets = [0, 0], sizes = [8, 32], strides = [1, 1]} : vector<8x128xf32> to vector<8x32xf32>
    %21 = vector.extract_strided_slice %18 {offsets = [0, 32], sizes = [8, 32], strides = [1, 1]} : vector<8x128xf32> to vector<8x32xf32>
    %22 = vector.extract_strided_slice %19 {offsets = [0, 64], sizes = [8, 32], strides = [1, 1]} : vector<8x128xf32> to vector<8x32xf32>
    %23 = vector.extract_strided_slice %18 {offsets = [0, 96], sizes = [8, 32], strides = [1, 1]} : vector<8x128xf32> to vector<8x32xf32>
    %24 = arith.mulf %21, %8 : vector<8x32xf32>
    %25 = arith.mulf %20, %22 : vector<8x32xf32>
    %26 = arith.addf %24, %25 : vector<8x32xf32>
    %27 = math.tanh %26 : vector<8x32xf32>
    %28 = arith.mulf %23, %27 : vector<8x32xf32>
    %c8 = arith.constant 8 : index
    %c0_14 = arith.constant 0 : index
    %29 = vector.load %arg11[%c8, %c0_14] : memref<64x128xf32, #tpu.memory_space<vmem>>, vector<8x128xf32>
    %30 = arith.truncf %28 : vector<8x32xf32> to vector<8x32xbf16>
    %c0_15 = arith.constant 0 : index
    %c0_16 = arith.constant 0 : index
    %31 = vector.load %arg3[%c0_15, %c0_16] : memref<32x128xbf16, #tpu.memory_space<vmem>>, vector<32x128xbf16>
    %cst_17 = arith.constant dense<0.000000e+00> : vector<8x128xf32>
    %32 = tpu.matmul %30, %31, %cst_17 {dimension_numbers = #tpu.dot_dimension_numbers<[1], [0], [0], [1], [0, 0, 1, 1], [], []>} : vector<8x32xbf16>, vector<32x128xbf16>, vector<8x128xf32> -> vector<8x128xf32>
    %33 = arith.addf %29, %32 : vector<8x128xf32>
    %34 = arith.negf %33 : vector<8x128xf32>
    %35 = math.exp %34 : vector<8x128xf32>
    %cst_18 = arith.constant 1.000000e+00 : f32
    %36 = vector.broadcast %cst_18 : f32 to vector<8x128xf32>
    %37 = arith.addf %36, %35 : vector<8x128xf32>
    %38 = arith.divf %36, %37 : vector<8x128xf32>
    %39 = math.tanh %33 : vector<8x128xf32>
    %40 = vector.extract_strided_slice %38 {offsets = [0, 0], sizes = [8, 32], strides = [1, 1]} : vector<8x128xf32> to vector<8x32xf32>
    %41 = vector.extract_strided_slice %38 {offsets = [0, 32], sizes = [8, 32], strides = [1, 1]} : vector<8x128xf32> to vector<8x32xf32>
    %42 = vector.extract_strided_slice %39 {offsets = [0, 64], sizes = [8, 32], strides = [1, 1]} : vector<8x128xf32> to vector<8x32xf32>
    %43 = vector.extract_strided_slice %38 {offsets = [0, 96], sizes = [8, 32], strides = [1, 1]} : vector<8x128xf32> to vector<8x32xf32>
    %44 = arith.mulf %41, %26 : vector<8x32xf32>
    %45 = arith.mulf %40, %42 : vector<8x32xf32>
    %46 = arith.addf %44, %45 : vector<8x32xf32>
    %47 = math.tanh %46 : vector<8x32xf32>
    %48 = arith.mulf %43, %47 : vector<8x32xf32>
    %49 = arith.truncf %28 : vector<8x32xf32> to vector<8x32xbf16>
    %c0_19 = arith.constant 0 : index
    %c0_20 = arith.constant 0 : index
    %50 = vector.load %arg5[%c0_19, %c0_20] : memref<32x128xbf16, #tpu.memory_space<vmem>>, vector<32x128xbf16>
    %cst_21 = arith.constant dense<0.000000e+00> : vector<8x128xf32>
    %51 = tpu.matmul %49, %50, %cst_21 {dimension_numbers = #tpu.dot_dimension_numbers<[1], [0], [0], [1], [0, 0, 1, 1], [], []>} : vector<8x32xbf16>, vector<32x128xbf16>, vector<8x128xf32> -> vector<8x128xf32>
    %c0_22 = arith.constant 0 : index
    %c0_23 = arith.constant 0 : index
    %52 = vector.load %arg7[%c0_22, %c0_23] : memref<1x128xf32, #tpu.memory_space<vmem>>, vector<1x128xf32>
    %53 = vector.broadcast %52 : vector<1x128xf32> to vector<8x128xf32>
    %54 = arith.addf %51, %53 : vector<8x128xf32>
    %55 = arith.truncf %8 : vector<8x32xf32> to vector<8x32xbf16>
    %c0_24 = arith.constant 0 : index
    %c0_25 = arith.constant 0 : index
    %56 = vector.load %arg6[%c0_24, %c0_25] : memref<32x128xbf16, #tpu.memory_space<vmem>>, vector<32x128xbf16>
    %cst_26 = arith.constant dense<0.000000e+00> : vector<8x128xf32>
    %57 = tpu.matmul %55, %56, %cst_26 {dimension_numbers = #tpu.dot_dimension_numbers<[1], [0], [0], [1], [0, 0, 1, 1], [], []>} : vector<8x32xbf16>, vector<32x128xbf16>, vector<8x128xf32> -> vector<8x128xf32>
    %58 = arith.addf %54, %57 : vector<8x128xf32>
    %59 = arith.negf %58 : vector<8x128xf32>
    %60 = math.exp %59 : vector<8x128xf32>
    %cst_27 = arith.constant 1.000000e+00 : f32
    %61 = vector.broadcast %cst_27 : f32 to vector<8x128xf32>
    %62 = arith.addf %61, %60 : vector<8x128xf32>
    %63 = arith.divf %61, %62 : vector<8x128xf32>
    %64 = math.tanh %58 : vector<8x128xf32>
    %65 = vector.extract_strided_slice %63 {offsets = [0, 0], sizes = [8, 32], strides = [1, 1]} : vector<8x128xf32> to vector<8x32xf32>
    %66 = vector.extract_strided_slice %63 {offsets = [0, 32], sizes = [8, 32], strides = [1, 1]} : vector<8x128xf32> to vector<8x32xf32>
    %67 = vector.extract_strided_slice %64 {offsets = [0, 64], sizes = [8, 32], strides = [1, 1]} : vector<8x128xf32> to vector<8x32xf32>
    %68 = vector.extract_strided_slice %63 {offsets = [0, 96], sizes = [8, 32], strides = [1, 1]} : vector<8x128xf32> to vector<8x32xf32>
    %69 = arith.mulf %66, %8 : vector<8x32xf32>
    %70 = arith.mulf %65, %67 : vector<8x32xf32>
    %71 = arith.addf %69, %70 : vector<8x32xf32>
    %72 = math.tanh %71 : vector<8x32xf32>
    %73 = arith.mulf %68, %72 : vector<8x32xf32>
    %c0_28 = arith.constant 0 : index
    %c0_29 = arith.constant 0 : index
    %c0_30 = arith.constant 0 : index
    %74 = vector.load %arg12[%c0_28, %c0_29, %c0_30] : memref<8x8x32xf32, #tpu.memory_space<vmem>>, vector<1x8x32xf32>
    %75 = vector.shape_cast %74 : vector<1x8x32xf32> to vector<8x32xf32>
    %76 = vector.shape_cast %73 : vector<8x32xf32> to vector<1x8x32xf32>
    tpu.vector_store %arg12[%c0_28, %c0_29, %c0_30], %76 {strides = array<i32>} : memref<8x8x32xf32, #tpu.memory_space<vmem>>, vector<1x8x32xf32>,
    %c16 = arith.constant 16 : index
    %c0_31 = arith.constant 0 : index
    %77 = vector.load %arg11[%c16, %c0_31] : memref<64x128xf32, #tpu.memory_space<vmem>>, vector<8x128xf32>
    %78 = arith.truncf %48 : vector<8x32xf32> to vector<8x32xbf16>
    %c0_32 = arith.constant 0 : index
    %c0_33 = arith.constant 0 : index
    %79 = vector.load %arg3[%c0_32, %c0_33] : memref<32x128xbf16, #tpu.memory_space<vmem>>, vector<32x128xbf16>
    %cst_34 = arith.constant dense<0.000000e+00> : vector<8x128xf32>
    %80 = tpu.matmul %78, %79, %cst_34 {dimension_numbers = #tpu.dot_dimension_numbers<[1], [0], [0], [1], [0, 0, 1, 1], [], []>} : vector<8x32xbf16>, vector<32x128xbf16>, vector<8x128xf32> -> vector<8x128xf32>
    %81 = arith.addf %77, %80 : vector<8x128xf32>
    %82 = arith.negf %81 : vector<8x128xf32>
    %83 = math.exp %82 : vector<8x128xf32>
    %cst_35 = arith.constant 1.000000e+00 : f32
    %84 = vector.broadcast %cst_35 : f32 to vector<8x128xf32>
    %85 = arith.addf %84, %83 : vector<8x128xf32>
    %86 = arith.divf %84, %85 : vector<8x128xf32>
    %87 = math.tanh %81 : vector<8x128xf32>
    %88 = vector.extract_strided_slice %86 {offsets = [0, 0], sizes = [8, 32], strides = [1, 1]} : vector<8x128xf32> to vector<8x32xf32>
    %89 = vector.extract_strided_slice %86 {offsets = [0, 32], sizes = [8, 32], strides = [1, 1]} : vector<8x128xf32> to vector<8x32xf32>
    %90 = vector.extract_strided_slice %87 {offsets = [0, 64], sizes = [8, 32], strides = [1, 1]} : vector<8x128xf32> to vector<8x32xf32>
    %91 = vector.extract_strided_slice %86 {offsets = [0, 96], sizes = [8, 32], strides = [1, 1]} : vector<8x128xf32> to vector<8x32xf32>
    %92 = arith.mulf %89, %46 : vector<8x32xf32>
    %93 = arith.mulf %88, %90 : vector<8x32xf32>
    %94 = arith.addf %92, %93 : vector<8x32xf32>
    %95 = math.tanh %94 : vector<8x32xf32>
    %96 = arith.mulf %91, %95 : vector<8x32xf32>
    %97 = arith.truncf %48 : vector<8x32xf32> to vector<8x32xbf16>
    %c0_36 = arith.constant 0 : index
    %c0_37 = arith.constant 0 : index
    %98 = vector.load %arg5[%c0_36, %c0_37] : memref<32x128xbf16, #tpu.memory_space<vmem>>, vector<32x128xbf16>
    %cst_38 = arith.constant dense<0.000000e+00> : vector<8x128xf32>
    %99 = tpu.matmul %97, %98, %cst_38 {dimension_numbers = #tpu.dot_dimension_numbers<[1], [0], [0], [1], [0, 0, 1, 1], [], []>} : vector<8x32xbf16>, vector<32x128xbf16>, vector<8x128xf32> -> vector<8x128xf32>
    %c0_39 = arith.constant 0 : index
    %c0_40 = arith.constant 0 : index
    %100 = vector.load %arg7[%c0_39, %c0_40] : memref<1x128xf32, #tpu.memory_space<vmem>>, vector<1x128xf32>
    %101 = vector.broadcast %100 : vector<1x128xf32> to vector<8x128xf32>
    %102 = arith.addf %99, %101 : vector<8x128xf32>
    %103 = arith.truncf %73 : vector<8x32xf32> to vector<8x32xbf16>
    %c0_41 = arith.constant 0 : index
    %c0_42 = arith.constant 0 : index
    %104 = vector.load %arg6[%c0_41, %c0_42] : memref<32x128xbf16, #tpu.memory_space<vmem>>, vector<32x128xbf16>
    %cst_43 = arith.constant dense<0.000000e+00> : vector<8x128xf32>
    %105 = tpu.matmul %103, %104, %cst_43 {dimension_numbers = #tpu.dot_dimension_numbers<[1], [0], [0], [1], [0, 0, 1, 1], [], []>} : vector<8x32xbf16>, vector<32x128xbf16>, vector<8x128xf32> -> vector<8x128xf32>
    %106 = arith.addf %102, %105 : vector<8x128xf32>
    %107 = arith.negf %106 : vector<8x128xf32>
    %108 = math.exp %107 : vector<8x128xf32>
    %cst_44 = arith.constant 1.000000e+00 : f32
    %109 = vector.broadcast %cst_44 : f32 to vector<8x128xf32>
    %110 = arith.addf %109, %108 : vector<8x128xf32>
    %111 = arith.divf %109, %110 : vector<8x128xf32>
    %112 = math.tanh %106 : vector<8x128xf32>
    %113 = vector.extract_strided_slice %111 {offsets = [0, 0], sizes = [8, 32], strides = [1, 1]} : vector<8x128xf32> to vector<8x32xf32>
    %114 = vector.extract_strided_slice %111 {offsets = [0, 32], sizes = [8, 32], strides = [1, 1]} : vector<8x128xf32> to vector<8x32xf32>
    %115 = vector.extract_strided_slice %112 {offsets = [0, 64], sizes = [8, 32], strides = [1, 1]} : vector<8x128xf32> to vector<8x32xf32>
    %116 = vector.extract_strided_slice %111 {offsets = [0, 96], sizes = [8, 32], strides = [1, 1]} : vector<8x128xf32> to vector<8x32xf32>
    %117 = arith.mulf %114, %71 : vector<8x32xf32>
    %118 = arith.mulf %113, %115 : vector<8x32xf32>
    %119 = arith.addf %117, %118 : vector<8x32xf32>
    %120 = math.tanh %119 : vector<8x32xf32>
    %121 = arith.mulf %116, %120 : vector<8x32xf32>
    %c1 = arith.constant 1 : index
    %c0_45 = arith.constant 0 : index
    %c0_46 = arith.constant 0 : index
    %122 = vector.load %arg12[%c1, %c0_45, %c0_46] : memref<8x8x32xf32, #tpu.memory_space<vmem>>, vector<1x8x32xf32>
    %123 = vector.shape_cast %122 : vector<1x8x32xf32> to vector<8x32xf32>
    %124 = vector.shape_cast %121 : vector<8x32xf32> to vector<1x8x32xf32>
    tpu.vector_store %arg12[%c1, %c0_45, %c0_46], %124 {strides = array<i32>} : memref<8x8x32xf32, #tpu.memory_space<vmem>>, vector<1x8x32xf32>,
    %c24 = arith.constant 24 : index
    %c0_47 = arith.constant 0 : index
    %125 = vector.load %arg11[%c24, %c0_47] : memref<64x128xf32, #tpu.memory_space<vmem>>, vector<8x128xf32>
    %126 = arith.truncf %96 : vector<8x32xf32> to vector<8x32xbf16>
    %c0_48 = arith.constant 0 : index
    %c0_49 = arith.constant 0 : index
    %127 = vector.load %arg3[%c0_48, %c0_49] : memref<32x128xbf16, #tpu.memory_space<vmem>>, vector<32x128xbf16>
    %cst_50 = arith.constant dense<0.000000e+00> : vector<8x128xf32>
    %128 = tpu.matmul %126, %127, %cst_50 {dimension_numbers = #tpu.dot_dimension_numbers<[1], [0], [0], [1], [0, 0, 1, 1], [], []>} : vector<8x32xbf16>, vector<32x128xbf16>, vector<8x128xf32> -> vector<8x128xf32>
    %129 = arith.addf %125, %128 : vector<8x128xf32>
    %130 = arith.negf %129 : vector<8x128xf32>
    %131 = math.exp %130 : vector<8x128xf32>
    %cst_51 = arith.constant 1.000000e+00 : f32
    %132 = vector.broadcast %cst_51 : f32 to vector<8x128xf32>
    %133 = arith.addf %132, %131 : vector<8x128xf32>
    %134 = arith.divf %132, %133 : vector<8x128xf32>
    %135 = math.tanh %129 : vector<8x128xf32>
    %136 = vector.extract_strided_slice %134 {offsets = [0, 0], sizes = [8, 32], strides = [1, 1]} : vector<8x128xf32> to vector<8x32xf32>
    %137 = vector.extract_strided_slice %134 {offsets = [0, 32], sizes = [8, 32], strides = [1, 1]} : vector<8x128xf32> to vector<8x32xf32>
    %138 = vector.extract_strided_slice %135 {offsets = [0, 64], sizes = [8, 32], strides = [1, 1]} : vector<8x128xf32> to vector<8x32xf32>
    %139 = vector.extract_strided_slice %134 {offsets = [0, 96], sizes = [8, 32], strides = [1, 1]} : vector<8x128xf32> to vector<8x32xf32>
    %140 = arith.mulf %137, %94 : vector<8x32xf32>
    %141 = arith.mulf %136, %138 : vector<8x32xf32>
    %142 = arith.addf %140, %141 : vector<8x32xf32>
    %143 = math.tanh %142 : vector<8x32xf32>
    %144 = arith.mulf %139, %143 : vector<8x32xf32>
    %145 = arith.truncf %96 : vector<8x32xf32> to vector<8x32xbf16>
    %c0_52 = arith.constant 0 : index
    %c0_53 = arith.constant 0 : index
    %146 = vector.load %arg5[%c0_52, %c0_53] : memref<32x128xbf16, #tpu.memory_space<vmem>>, vector<32x128xbf16>
    %cst_54 = arith.constant dense<0.000000e+00> : vector<8x128xf32>
    %147 = tpu.matmul %145, %146, %cst_54 {dimension_numbers = #tpu.dot_dimension_numbers<[1], [0], [0], [1], [0, 0, 1, 1], [], []>} : vector<8x32xbf16>, vector<32x128xbf16>, vector<8x128xf32> -> vector<8x128xf32>
    %c0_55 = arith.constant 0 : index
    %c0_56 = arith.constant 0 : index
    %148 = vector.load %arg7[%c0_55, %c0_56] : memref<1x128xf32, #tpu.memory_space<vmem>>, vector<1x128xf32>
    %149 = vector.broadcast %148 : vector<1x128xf32> to vector<8x128xf32>
    %150 = arith.addf %147, %149 : vector<8x128xf32>
    %151 = arith.truncf %121 : vector<8x32xf32> to vector<8x32xbf16>
    %c0_57 = arith.constant 0 : index
    %c0_58 = arith.constant 0 : index
    %152 = vector.load %arg6[%c0_57, %c0_58] : memref<32x128xbf16, #tpu.memory_space<vmem>>, vector<32x128xbf16>
    %cst_59 = arith.constant dense<0.000000e+00> : vector<8x128xf32>
    %153 = tpu.matmul %151, %152, %cst_59 {dimension_numbers = #tpu.dot_dimension_numbers<[1], [0], [0], [1], [0, 0, 1, 1], [], []>} : vector<8x32xbf16>, vector<32x128xbf16>, vector<8x128xf32> -> vector<8x128xf32>
    %154 = arith.addf %150, %153 : vector<8x128xf32>
    %155 = arith.negf %154 : vector<8x128xf32>
    %156 = math.exp %155 : vector<8x128xf32>
    %cst_60 = arith.constant 1.000000e+00 : f32
    %157 = vector.broadcast %cst_60 : f32 to vector<8x128xf32>
    %158 = arith.addf %157, %156 : vector<8x128xf32>
    %159 = arith.divf %157, %158 : vector<8x128xf32>
    %160 = math.tanh %154 : vector<8x128xf32>
    %161 = vector.extract_strided_slice %159 {offsets = [0, 0], sizes = [8, 32], strides = [1, 1]} : vector<8x128xf32> to vector<8x32xf32>
    %162 = vector.extract_strided_slice %159 {offsets = [0, 32], sizes = [8, 32], strides = [1, 1]} : vector<8x128xf32> to vector<8x32xf32>
    %163 = vector.extract_strided_slice %160 {offsets = [0, 64], sizes = [8, 32], strides = [1, 1]} : vector<8x128xf32> to vector<8x32xf32>
    %164 = vector.extract_strided_slice %159 {offsets = [0, 96], sizes = [8, 32], strides = [1, 1]} : vector<8x128xf32> to vector<8x32xf32>
    %165 = arith.mulf %162, %119 : vector<8x32xf32>
    %166 = arith.mulf %161, %163 : vector<8x32xf32>
    %167 = arith.addf %165, %166 : vector<8x32xf32>
    %168 = math.tanh %167 : vector<8x32xf32>
    %169 = arith.mulf %164, %168 : vector<8x32xf32>
    %c2 = arith.constant 2 : index
    %c0_61 = arith.constant 0 : index
    %c0_62 = arith.constant 0 : index
    %170 = vector.load %arg12[%c2, %c0_61, %c0_62] : memref<8x8x32xf32, #tpu.memory_space<vmem>>, vector<1x8x32xf32>
    %171 = vector.shape_cast %170 : vector<1x8x32xf32> to vector<8x32xf32>
    %172 = vector.shape_cast %169 : vector<8x32xf32> to vector<1x8x32xf32>
    tpu.vector_store %arg12[%c2, %c0_61, %c0_62], %172 {strides = array<i32>} : memref<8x8x32xf32, #tpu.memory_space<vmem>>, vector<1x8x32xf32>,
    %c32 = arith.constant 32 : index
    %c0_63 = arith.constant 0 : index
    %173 = vector.load %arg11[%c32, %c0_63] : memref<64x128xf32, #tpu.memory_space<vmem>>, vector<8x128xf32>
    %174 = arith.truncf %144 : vector<8x32xf32> to vector<8x32xbf16>
    %c0_64 = arith.constant 0 : index
    %c0_65 = arith.constant 0 : index
    %175 = vector.load %arg3[%c0_64, %c0_65] : memref<32x128xbf16, #tpu.memory_space<vmem>>, vector<32x128xbf16>
    %cst_66 = arith.constant dense<0.000000e+00> : vector<8x128xf32>
    %176 = tpu.matmul %174, %175, %cst_66 {dimension_numbers = #tpu.dot_dimension_numbers<[1], [0], [0], [1], [0, 0, 1, 1], [], []>} : vector<8x32xbf16>, vector<32x128xbf16>, vector<8x128xf32> -> vector<8x128xf32>
    %177 = arith.addf %173, %176 : vector<8x128xf32>
    %178 = arith.negf %177 : vector<8x128xf32>
    %179 = math.exp %178 : vector<8x128xf32>
    %cst_67 = arith.constant 1.000000e+00 : f32
    %180 = vector.broadcast %cst_67 : f32 to vector<8x128xf32>
    %181 = arith.addf %180, %179 : vector<8x128xf32>
    %182 = arith.divf %180, %181 : vector<8x128xf32>
    %183 = math.tanh %177 : vector<8x128xf32>
    %184 = vector.extract_strided_slice %182 {offsets = [0, 0], sizes = [8, 32], strides = [1, 1]} : vector<8x128xf32> to vector<8x32xf32>
    %185 = vector.extract_strided_slice %182 {offsets = [0, 32], sizes = [8, 32], strides = [1, 1]} : vector<8x128xf32> to vector<8x32xf32>
    %186 = vector.extract_strided_slice %183 {offsets = [0, 64], sizes = [8, 32], strides = [1, 1]} : vector<8x128xf32> to vector<8x32xf32>
    %187 = vector.extract_strided_slice %182 {offsets = [0, 96], sizes = [8, 32], strides = [1, 1]} : vector<8x128xf32> to vector<8x32xf32>
    %188 = arith.mulf %185, %142 : vector<8x32xf32>
    %189 = arith.mulf %184, %186 : vector<8x32xf32>
    %190 = arith.addf %188, %189 : vector<8x32xf32>
    %191 = math.tanh %190 : vector<8x32xf32>
    %192 = arith.mulf %187, %191 : vector<8x32xf32>
    %193 = arith.truncf %144 : vector<8x32xf32> to vector<8x32xbf16>
    %c0_68 = arith.constant 0 : index
    %c0_69 = arith.constant 0 : index
    %194 = vector.load %arg5[%c0_68, %c0_69] : memref<32x128xbf16, #tpu.memory_space<vmem>>, vector<32x128xbf16>
    %cst_70 = arith.constant dense<0.000000e+00> : vector<8x128xf32>
    %195 = tpu.matmul %193, %194, %cst_70 {dimension_numbers = #tpu.dot_dimension_numbers<[1], [0], [0], [1], [0, 0, 1, 1], [], []>} : vector<8x32xbf16>, vector<32x128xbf16>, vector<8x128xf32> -> vector<8x128xf32>
    %c0_71 = arith.constant 0 : index
    %c0_72 = arith.constant 0 : index
    %196 = vector.load %arg7[%c0_71, %c0_72] : memref<1x128xf32, #tpu.memory_space<vmem>>, vector<1x128xf32>
    %197 = vector.broadcast %196 : vector<1x128xf32> to vector<8x128xf32>
    %198 = arith.addf %195, %197 : vector<8x128xf32>
    %199 = arith.truncf %169 : vector<8x32xf32> to vector<8x32xbf16>
    %c0_73 = arith.constant 0 : index
    %c0_74 = arith.constant 0 : index
    %200 = vector.load %arg6[%c0_73, %c0_74] : memref<32x128xbf16, #tpu.memory_space<vmem>>, vector<32x128xbf16>
    %cst_75 = arith.constant dense<0.000000e+00> : vector<8x128xf32>
    %201 = tpu.matmul %199, %200, %cst_75 {dimension_numbers = #tpu.dot_dimension_numbers<[1], [0], [0], [1], [0, 0, 1, 1], [], []>} : vector<8x32xbf16>, vector<32x128xbf16>, vector<8x128xf32> -> vector<8x128xf32>
    %202 = arith.addf %198, %201 : vector<8x128xf32>
    %203 = arith.negf %202 : vector<8x128xf32>
    %204 = math.exp %203 : vector<8x128xf32>
    %cst_76 = arith.constant 1.000000e+00 : f32
    %205 = vector.broadcast %cst_76 : f32 to vector<8x128xf32>
    %206 = arith.addf %205, %204 : vector<8x128xf32>
    %207 = arith.divf %205, %206 : vector<8x128xf32>
    %208 = math.tanh %202 : vector<8x128xf32>
    %209 = vector.extract_strided_slice %207 {offsets = [0, 0], sizes = [8, 32], strides = [1, 1]} : vector<8x128xf32> to vector<8x32xf32>
    %210 = vector.extract_strided_slice %207 {offsets = [0, 32], sizes = [8, 32], strides = [1, 1]} : vector<8x128xf32> to vector<8x32xf32>
    %211 = vector.extract_strided_slice %208 {offsets = [0, 64], sizes = [8, 32], strides = [1, 1]} : vector<8x128xf32> to vector<8x32xf32>
    %212 = vector.extract_strided_slice %207 {offsets = [0, 96], sizes = [8, 32], strides = [1, 1]} : vector<8x128xf32> to vector<8x32xf32>
    %213 = arith.mulf %210, %167 : vector<8x32xf32>
    %214 = arith.mulf %209, %211 : vector<8x32xf32>
    %215 = arith.addf %213, %214 : vector<8x32xf32>
    %216 = math.tanh %215 : vector<8x32xf32>
    %217 = arith.mulf %212, %216 : vector<8x32xf32>
    %c3 = arith.constant 3 : index
    %c0_77 = arith.constant 0 : index
    %c0_78 = arith.constant 0 : index
    %218 = vector.load %arg12[%c3, %c0_77, %c0_78] : memref<8x8x32xf32, #tpu.memory_space<vmem>>, vector<1x8x32xf32>
    %219 = vector.shape_cast %218 : vector<1x8x32xf32> to vector<8x32xf32>
    %220 = vector.shape_cast %217 : vector<8x32xf32> to vector<1x8x32xf32>
    tpu.vector_store %arg12[%c3, %c0_77, %c0_78], %220 {strides = array<i32>} : memref<8x8x32xf32, #tpu.memory_space<vmem>>, vector<1x8x32xf32>,
    %c40 = arith.constant 40 : index
    %c0_79 = arith.constant 0 : index
    %221 = vector.load %arg11[%c40, %c0_79] : memref<64x128xf32, #tpu.memory_space<vmem>>, vector<8x128xf32>
    %222 = arith.truncf %192 : vector<8x32xf32> to vector<8x32xbf16>
    %c0_80 = arith.constant 0 : index
    %c0_81 = arith.constant 0 : index
    %223 = vector.load %arg3[%c0_80, %c0_81] : memref<32x128xbf16, #tpu.memory_space<vmem>>, vector<32x128xbf16>
    %cst_82 = arith.constant dense<0.000000e+00> : vector<8x128xf32>
    %224 = tpu.matmul %222, %223, %cst_82 {dimension_numbers = #tpu.dot_dimension_numbers<[1], [0], [0], [1], [0, 0, 1, 1], [], []>} : vector<8x32xbf16>, vector<32x128xbf16>, vector<8x128xf32> -> vector<8x128xf32>
    %225 = arith.addf %221, %224 : vector<8x128xf32>
    %226 = arith.negf %225 : vector<8x128xf32>
    %227 = math.exp %226 : vector<8x128xf32>
    %cst_83 = arith.constant 1.000000e+00 : f32
    %228 = vector.broadcast %cst_83 : f32 to vector<8x128xf32>
    %229 = arith.addf %228, %227 : vector<8x128xf32>
    %230 = arith.divf %228, %229 : vector<8x128xf32>
    %231 = math.tanh %225 : vector<8x128xf32>
    %232 = vector.extract_strided_slice %230 {offsets = [0, 0], sizes = [8, 32], strides = [1, 1]} : vector<8x128xf32> to vector<8x32xf32>
    %233 = vector.extract_strided_slice %230 {offsets = [0, 32], sizes = [8, 32], strides = [1, 1]} : vector<8x128xf32> to vector<8x32xf32>
    %234 = vector.extract_strided_slice %231 {offsets = [0, 64], sizes = [8, 32], strides = [1, 1]} : vector<8x128xf32> to vector<8x32xf32>
    %235 = vector.extract_strided_slice %230 {offsets = [0, 96], sizes = [8, 32], strides = [1, 1]} : vector<8x128xf32> to vector<8x32xf32>
    %236 = arith.mulf %233, %190 : vector<8x32xf32>
    %237 = arith.mulf %232, %234 : vector<8x32xf32>
    %238 = arith.addf %236, %237 : vector<8x32xf32>
    %239 = math.tanh %238 : vector<8x32xf32>
    %240 = arith.mulf %235, %239 : vector<8x32xf32>
    %241 = arith.truncf %192 : vector<8x32xf32> to vector<8x32xbf16>
    %c0_84 = arith.constant 0 : index
    %c0_85 = arith.constant 0 : index
    %242 = vector.load %arg5[%c0_84, %c0_85] : memref<32x128xbf16, #tpu.memory_space<vmem>>, vector<32x128xbf16>
    %cst_86 = arith.constant dense<0.000000e+00> : vector<8x128xf32>
    %243 = tpu.matmul %241, %242, %cst_86 {dimension_numbers = #tpu.dot_dimension_numbers<[1], [0], [0], [1], [0, 0, 1, 1], [], []>} : vector<8x32xbf16>, vector<32x128xbf16>, vector<8x128xf32> -> vector<8x128xf32>
    %c0_87 = arith.constant 0 : index
    %c0_88 = arith.constant 0 : index
    %244 = vector.load %arg7[%c0_87, %c0_88] : memref<1x128xf32, #tpu.memory_space<vmem>>, vector<1x128xf32>
    %245 = vector.broadcast %244 : vector<1x128xf32> to vector<8x128xf32>
    %246 = arith.addf %243, %245 : vector<8x128xf32>
    %247 = arith.truncf %217 : vector<8x32xf32> to vector<8x32xbf16>
    %c0_89 = arith.constant 0 : index
    %c0_90 = arith.constant 0 : index
    %248 = vector.load %arg6[%c0_89, %c0_90] : memref<32x128xbf16, #tpu.memory_space<vmem>>, vector<32x128xbf16>
    %cst_91 = arith.constant dense<0.000000e+00> : vector<8x128xf32>
    %249 = tpu.matmul %247, %248, %cst_91 {dimension_numbers = #tpu.dot_dimension_numbers<[1], [0], [0], [1], [0, 0, 1, 1], [], []>} : vector<8x32xbf16>, vector<32x128xbf16>, vector<8x128xf32> -> vector<8x128xf32>
    %250 = arith.addf %246, %249 : vector<8x128xf32>
    %251 = arith.negf %250 : vector<8x128xf32>
    %252 = math.exp %251 : vector<8x128xf32>
    %cst_92 = arith.constant 1.000000e+00 : f32
    %253 = vector.broadcast %cst_92 : f32 to vector<8x128xf32>
    %254 = arith.addf %253, %252 : vector<8x128xf32>
    %255 = arith.divf %253, %254 : vector<8x128xf32>
    %256 = math.tanh %250 : vector<8x128xf32>
    %257 = vector.extract_strided_slice %255 {offsets = [0, 0], sizes = [8, 32], strides = [1, 1]} : vector<8x128xf32> to vector<8x32xf32>
    %258 = vector.extract_strided_slice %255 {offsets = [0, 32], sizes = [8, 32], strides = [1, 1]} : vector<8x128xf32> to vector<8x32xf32>
    %259 = vector.extract_strided_slice %256 {offsets = [0, 64], sizes = [8, 32], strides = [1, 1]} : vector<8x128xf32> to vector<8x32xf32>
    %260 = vector.extract_strided_slice %255 {offsets = [0, 96], sizes = [8, 32], strides = [1, 1]} : vector<8x128xf32> to vector<8x32xf32>
    %261 = arith.mulf %258, %215 : vector<8x32xf32>
    %262 = arith.mulf %257, %259 : vector<8x32xf32>
    %263 = arith.addf %261, %262 : vector<8x32xf32>
    %264 = math.tanh %263 : vector<8x32xf32>
    %265 = arith.mulf %260, %264 : vector<8x32xf32>
    %c4 = arith.constant 4 : index
    %c0_93 = arith.constant 0 : index
    %c0_94 = arith.constant 0 : index
    %266 = vector.load %arg12[%c4, %c0_93, %c0_94] : memref<8x8x32xf32, #tpu.memory_space<vmem>>, vector<1x8x32xf32>
    %267 = vector.shape_cast %266 : vector<1x8x32xf32> to vector<8x32xf32>
    %268 = vector.shape_cast %265 : vector<8x32xf32> to vector<1x8x32xf32>
    tpu.vector_store %arg12[%c4, %c0_93, %c0_94], %268 {strides = array<i32>} : memref<8x8x32xf32, #tpu.memory_space<vmem>>, vector<1x8x32xf32>,
    %c48 = arith.constant 48 : index
    %c0_95 = arith.constant 0 : index
    %269 = vector.load %arg11[%c48, %c0_95] : memref<64x128xf32, #tpu.memory_space<vmem>>, vector<8x128xf32>
    %270 = arith.truncf %240 : vector<8x32xf32> to vector<8x32xbf16>
    %c0_96 = arith.constant 0 : index
    %c0_97 = arith.constant 0 : index
    %271 = vector.load %arg3[%c0_96, %c0_97] : memref<32x128xbf16, #tpu.memory_space<vmem>>, vector<32x128xbf16>
    %cst_98 = arith.constant dense<0.000000e+00> : vector<8x128xf32>
    %272 = tpu.matmul %270, %271, %cst_98 {dimension_numbers = #tpu.dot_dimension_numbers<[1], [0], [0], [1], [0, 0, 1, 1], [], []>} : vector<8x32xbf16>, vector<32x128xbf16>, vector<8x128xf32> -> vector<8x128xf32>
    %273 = arith.addf %269, %272 : vector<8x128xf32>
    %274 = arith.negf %273 : vector<8x128xf32>
    %275 = math.exp %274 : vector<8x128xf32>
    %cst_99 = arith.constant 1.000000e+00 : f32
    %276 = vector.broadcast %cst_99 : f32 to vector<8x128xf32>
    %277 = arith.addf %276, %275 : vector<8x128xf32>
    %278 = arith.divf %276, %277 : vector<8x128xf32>
    %279 = math.tanh %273 : vector<8x128xf32>
    %280 = vector.extract_strided_slice %278 {offsets = [0, 0], sizes = [8, 32], strides = [1, 1]} : vector<8x128xf32> to vector<8x32xf32>
    %281 = vector.extract_strided_slice %278 {offsets = [0, 32], sizes = [8, 32], strides = [1, 1]} : vector<8x128xf32> to vector<8x32xf32>
    %282 = vector.extract_strided_slice %279 {offsets = [0, 64], sizes = [8, 32], strides = [1, 1]} : vector<8x128xf32> to vector<8x32xf32>
    %283 = vector.extract_strided_slice %278 {offsets = [0, 96], sizes = [8, 32], strides = [1, 1]} : vector<8x128xf32> to vector<8x32xf32>
    %284 = arith.mulf %281, %238 : vector<8x32xf32>
    %285 = arith.mulf %280, %282 : vector<8x32xf32>
    %286 = arith.addf %284, %285 : vector<8x32xf32>
    %287 = math.tanh %286 : vector<8x32xf32>
    %288 = arith.mulf %283, %287 : vector<8x32xf32>
    %289 = arith.truncf %240 : vector<8x32xf32> to vector<8x32xbf16>
    %c0_100 = arith.constant 0 : index
    %c0_101 = arith.constant 0 : index
    %290 = vector.load %arg5[%c0_100, %c0_101] : memref<32x128xbf16, #tpu.memory_space<vmem>>, vector<32x128xbf16>
    %cst_102 = arith.constant dense<0.000000e+00> : vector<8x128xf32>
    %291 = tpu.matmul %289, %290, %cst_102 {dimension_numbers = #tpu.dot_dimension_numbers<[1], [0], [0], [1], [0, 0, 1, 1], [], []>} : vector<8x32xbf16>, vector<32x128xbf16>, vector<8x128xf32> -> vector<8x128xf32>
    %c0_103 = arith.constant 0 : index
    %c0_104 = arith.constant 0 : index
    %292 = vector.load %arg7[%c0_103, %c0_104] : memref<1x128xf32, #tpu.memory_space<vmem>>, vector<1x128xf32>
    %293 = vector.broadcast %292 : vector<1x128xf32> to vector<8x128xf32>
    %294 = arith.addf %291, %293 : vector<8x128xf32>
    %295 = arith.truncf %265 : vector<8x32xf32> to vector<8x32xbf16>
    %c0_105 = arith.constant 0 : index
    %c0_106 = arith.constant 0 : index
    %296 = vector.load %arg6[%c0_105, %c0_106] : memref<32x128xbf16, #tpu.memory_space<vmem>>, vector<32x128xbf16>
    %cst_107 = arith.constant dense<0.000000e+00> : vector<8x128xf32>
    %297 = tpu.matmul %295, %296, %cst_107 {dimension_numbers = #tpu.dot_dimension_numbers<[1], [0], [0], [1], [0, 0, 1, 1], [], []>} : vector<8x32xbf16>, vector<32x128xbf16>, vector<8x128xf32> -> vector<8x128xf32>
    %298 = arith.addf %294, %297 : vector<8x128xf32>
    %299 = arith.negf %298 : vector<8x128xf32>
    %300 = math.exp %299 : vector<8x128xf32>
    %cst_108 = arith.constant 1.000000e+00 : f32
    %301 = vector.broadcast %cst_108 : f32 to vector<8x128xf32>
    %302 = arith.addf %301, %300 : vector<8x128xf32>
    %303 = arith.divf %301, %302 : vector<8x128xf32>
    %304 = math.tanh %298 : vector<8x128xf32>
    %305 = vector.extract_strided_slice %303 {offsets = [0, 0], sizes = [8, 32], strides = [1, 1]} : vector<8x128xf32> to vector<8x32xf32>
    %306 = vector.extract_strided_slice %303 {offsets = [0, 32], sizes = [8, 32], strides = [1, 1]} : vector<8x128xf32> to vector<8x32xf32>
    %307 = vector.extract_strided_slice %304 {offsets = [0, 64], sizes = [8, 32], strides = [1, 1]} : vector<8x128xf32> to vector<8x32xf32>
    %308 = vector.extract_strided_slice %303 {offsets = [0, 96], sizes = [8, 32], strides = [1, 1]} : vector<8x128xf32> to vector<8x32xf32>
    %309 = arith.mulf %306, %263 : vector<8x32xf32>
    %310 = arith.mulf %305, %307 : vector<8x32xf32>
    %311 = arith.addf %309, %310 : vector<8x32xf32>
    %312 = math.tanh %311 : vector<8x32xf32>
    %313 = arith.mulf %308, %312 : vector<8x32xf32>
    %c5 = arith.constant 5 : index
    %c0_109 = arith.constant 0 : index
    %c0_110 = arith.constant 0 : index
    %314 = vector.load %arg12[%c5, %c0_109, %c0_110] : memref<8x8x32xf32, #tpu.memory_space<vmem>>, vector<1x8x32xf32>
    %315 = vector.shape_cast %314 : vector<1x8x32xf32> to vector<8x32xf32>
    %316 = vector.shape_cast %313 : vector<8x32xf32> to vector<1x8x32xf32>
    tpu.vector_store %arg12[%c5, %c0_109, %c0_110], %316 {strides = array<i32>} : memref<8x8x32xf32, #tpu.memory_space<vmem>>, vector<1x8x32xf32>,
    %c56 = arith.constant 56 : index
    %c0_111 = arith.constant 0 : index
    %317 = vector.load %arg11[%c56, %c0_111] : memref<64x128xf32, #tpu.memory_space<vmem>>, vector<8x128xf32>
    %318 = arith.truncf %288 : vector<8x32xf32> to vector<8x32xbf16>
    %c0_112 = arith.constant 0 : index
    %c0_113 = arith.constant 0 : index
    %319 = vector.load %arg3[%c0_112, %c0_113] : memref<32x128xbf16, #tpu.memory_space<vmem>>, vector<32x128xbf16>
    %cst_114 = arith.constant dense<0.000000e+00> : vector<8x128xf32>
    %320 = tpu.matmul %318, %319, %cst_114 {dimension_numbers = #tpu.dot_dimension_numbers<[1], [0], [0], [1], [0, 0, 1, 1], [], []>} : vector<8x32xbf16>, vector<32x128xbf16>, vector<8x128xf32> -> vector<8x128xf32>
    %321 = arith.addf %317, %320 : vector<8x128xf32>
    %322 = arith.negf %321 : vector<8x128xf32>
    %323 = math.exp %322 : vector<8x128xf32>
    %cst_115 = arith.constant 1.000000e+00 : f32
    %324 = vector.broadcast %cst_115 : f32 to vector<8x128xf32>
    %325 = arith.addf %324, %323 : vector<8x128xf32>
    %326 = arith.divf %324, %325 : vector<8x128xf32>
    %327 = math.tanh %321 : vector<8x128xf32>
    %328 = vector.extract_strided_slice %326 {offsets = [0, 0], sizes = [8, 32], strides = [1, 1]} : vector<8x128xf32> to vector<8x32xf32>
    %329 = vector.extract_strided_slice %326 {offsets = [0, 32], sizes = [8, 32], strides = [1, 1]} : vector<8x128xf32> to vector<8x32xf32>
    %330 = vector.extract_strided_slice %327 {offsets = [0, 64], sizes = [8, 32], strides = [1, 1]} : vector<8x128xf32> to vector<8x32xf32>
    %331 = vector.extract_strided_slice %326 {offsets = [0, 96], sizes = [8, 32], strides = [1, 1]} : vector<8x128xf32> to vector<8x32xf32>
    %332 = arith.mulf %329, %286 : vector<8x32xf32>
    %333 = arith.mulf %328, %330 : vector<8x32xf32>
    %334 = arith.addf %332, %333 : vector<8x32xf32>
    %335 = math.tanh %334 : vector<8x32xf32>
    %336 = arith.mulf %331, %335 : vector<8x32xf32>
    %337 = arith.truncf %288 : vector<8x32xf32> to vector<8x32xbf16>
    %c0_116 = arith.constant 0 : index
    %c0_117 = arith.constant 0 : index
    %338 = vector.load %arg5[%c0_116, %c0_117] : memref<32x128xbf16, #tpu.memory_space<vmem>>, vector<32x128xbf16>
    %cst_118 = arith.constant dense<0.000000e+00> : vector<8x128xf32>
    %339 = tpu.matmul %337, %338, %cst_118 {dimension_numbers = #tpu.dot_dimension_numbers<[1], [0], [0], [1], [0, 0, 1, 1], [], []>} : vector<8x32xbf16>, vector<32x128xbf16>, vector<8x128xf32> -> vector<8x128xf32>
    %c0_119 = arith.constant 0 : index
    %c0_120 = arith.constant 0 : index
    %340 = vector.load %arg7[%c0_119, %c0_120] : memref<1x128xf32, #tpu.memory_space<vmem>>, vector<1x128xf32>
    %341 = vector.broadcast %340 : vector<1x128xf32> to vector<8x128xf32>
    %342 = arith.addf %339, %341 : vector<8x128xf32>
    %343 = arith.truncf %313 : vector<8x32xf32> to vector<8x32xbf16>
    %c0_121 = arith.constant 0 : index
    %c0_122 = arith.constant 0 : index
    %344 = vector.load %arg6[%c0_121, %c0_122] : memref<32x128xbf16, #tpu.memory_space<vmem>>, vector<32x128xbf16>
    %cst_123 = arith.constant dense<0.000000e+00> : vector<8x128xf32>
    %345 = tpu.matmul %343, %344, %cst_123 {dimension_numbers = #tpu.dot_dimension_numbers<[1], [0], [0], [1], [0, 0, 1, 1], [], []>} : vector<8x32xbf16>, vector<32x128xbf16>, vector<8x128xf32> -> vector<8x128xf32>
    %346 = arith.addf %342, %345 : vector<8x128xf32>
    %347 = arith.negf %346 : vector<8x128xf32>
    %348 = math.exp %347 : vector<8x128xf32>
    %cst_124 = arith.constant 1.000000e+00 : f32
    %349 = vector.broadcast %cst_124 : f32 to vector<8x128xf32>
    %350 = arith.addf %349, %348 : vector<8x128xf32>
    %351 = arith.divf %349, %350 : vector<8x128xf32>
    %352 = math.tanh %346 : vector<8x128xf32>
    %353 = vector.extract_strided_slice %351 {offsets = [0, 0], sizes = [8, 32], strides = [1, 1]} : vector<8x128xf32> to vector<8x32xf32>
    %354 = vector.extract_strided_slice %351 {offsets = [0, 32], sizes = [8, 32], strides = [1, 1]} : vector<8x128xf32> to vector<8x32xf32>
    %355 = vector.extract_strided_slice %352 {offsets = [0, 64], sizes = [8, 32], strides = [1, 1]} : vector<8x128xf32> to vector<8x32xf32>
    %356 = vector.extract_strided_slice %351 {offsets = [0, 96], sizes = [8, 32], strides = [1, 1]} : vector<8x128xf32> to vector<8x32xf32>
    %357 = arith.mulf %354, %311 : vector<8x32xf32>
    %358 = arith.mulf %353, %355 : vector<8x32xf32>
    %359 = arith.addf %357, %358 : vector<8x32xf32>
    %360 = math.tanh %359 : vector<8x32xf32>
    %361 = arith.mulf %356, %360 : vector<8x32xf32>
    %c6 = arith.constant 6 : index
    %c0_125 = arith.constant 0 : index
    %c0_126 = arith.constant 0 : index
    %362 = vector.load %arg12[%c6, %c0_125, %c0_126] : memref<8x8x32xf32, #tpu.memory_space<vmem>>, vector<1x8x32xf32>
    %363 = vector.shape_cast %362 : vector<1x8x32xf32> to vector<8x32xf32>
    %364 = vector.shape_cast %361 : vector<8x32xf32> to vector<1x8x32xf32>
    tpu.vector_store %arg12[%c6, %c0_125, %c0_126], %364 {strides = array<i32>} : memref<8x8x32xf32, #tpu.memory_space<vmem>>, vector<1x8x32xf32>,
    %365 = arith.truncf %336 : vector<8x32xf32> to vector<8x32xbf16>
    %c0_127 = arith.constant 0 : index
    %c0_128 = arith.constant 0 : index
    %366 = vector.load %arg5[%c0_127, %c0_128] : memref<32x128xbf16, #tpu.memory_space<vmem>>, vector<32x128xbf16>
    %cst_129 = arith.constant dense<0.000000e+00> : vector<8x128xf32>
    %367 = tpu.matmul %365, %366, %cst_129 {dimension_numbers = #tpu.dot_dimension_numbers<[1], [0], [0], [1], [0, 0, 1, 1], [], []>} : vector<8x32xbf16>, vector<32x128xbf16>, vector<8x128xf32> -> vector<8x128xf32>
    %c0_130 = arith.constant 0 : index
    %c0_131 = arith.constant 0 : index
    %368 = vector.load %arg7[%c0_130, %c0_131] : memref<1x128xf32, #tpu.memory_space<vmem>>, vector<1x128xf32>
    %369 = vector.broadcast %368 : vector<1x128xf32> to vector<8x128xf32>
    %370 = arith.addf %367, %369 : vector<8x128xf32>
    %371 = arith.truncf %361 : vector<8x32xf32> to vector<8x32xbf16>
    %c0_132 = arith.constant 0 : index
    %c0_133 = arith.constant 0 : index
    %372 = vector.load %arg6[%c0_132, %c0_133] : memref<32x128xbf16, #tpu.memory_space<vmem>>, vector<32x128xbf16>
    %cst_134 = arith.constant dense<0.000000e+00> : vector<8x128xf32>
    %373 = tpu.matmul %371, %372, %cst_134 {dimension_numbers = #tpu.dot_dimension_numbers<[1], [0], [0], [1], [0, 0, 1, 1], [], []>} : vector<8x32xbf16>, vector<32x128xbf16>, vector<8x128xf32> -> vector<8x128xf32>
    %374 = arith.addf %370, %373 : vector<8x128xf32>
    %375 = arith.negf %374 : vector<8x128xf32>
    %376 = math.exp %375 : vector<8x128xf32>
    %cst_135 = arith.constant 1.000000e+00 : f32
    %377 = vector.broadcast %cst_135 : f32 to vector<8x128xf32>
    %378 = arith.addf %377, %376 : vector<8x128xf32>
    %379 = arith.divf %377, %378 : vector<8x128xf32>
    %380 = math.tanh %374 : vector<8x128xf32>
    %381 = vector.extract_strided_slice %379 {offsets = [0, 0], sizes = [8, 32], strides = [1, 1]} : vector<8x128xf32> to vector<8x32xf32>
    %382 = vector.extract_strided_slice %379 {offsets = [0, 32], sizes = [8, 32], strides = [1, 1]} : vector<8x128xf32> to vector<8x32xf32>
    %383 = vector.extract_strided_slice %380 {offsets = [0, 64], sizes = [8, 32], strides = [1, 1]} : vector<8x128xf32> to vector<8x32xf32>
    %384 = vector.extract_strided_slice %379 {offsets = [0, 96], sizes = [8, 32], strides = [1, 1]} : vector<8x128xf32> to vector<8x32xf32>
    %385 = arith.mulf %382, %359 : vector<8x32xf32>
    %386 = arith.mulf %381, %383 : vector<8x32xf32>
    %387 = arith.addf %385, %386 : vector<8x32xf32>
    %388 = math.tanh %387 : vector<8x32xf32>
    %389 = arith.mulf %384, %388 : vector<8x32xf32>
    %c7 = arith.constant 7 : index
    %c0_136 = arith.constant 0 : index
    %c0_137 = arith.constant 0 : index
    %390 = vector.load %arg12[%c7, %c0_136, %c0_137] : memref<8x8x32xf32, #tpu.memory_space<vmem>>, vector<1x8x32xf32>
    %391 = vector.shape_cast %390 : vector<1x8x32xf32> to vector<8x32xf32>
    %392 = vector.shape_cast %389 : vector<8x32xf32> to vector<1x8x32xf32>
    tpu.vector_store %arg12[%c7, %c0_136, %c0_137], %392 {strides = array<i32>} : memref<8x8x32xf32, #tpu.memory_space<vmem>>, vector<1x8x32xf32>,
    %c0_138 = arith.constant 0 : index
    %c0_139 = arith.constant 0 : index
    %c0_140 = arith.constant 0 : index
    %393 = vector.load %arg12[%c0_138, %c0_139, %c0_140] : memref<8x8x32xf32, #tpu.memory_space<vmem>>, vector<8x8x32xf32>
    %394 = vector.extract_strided_slice %393 {offsets = [0, 1, 0], sizes = [8, 1, 32], strides = [1, 1, 1]} : vector<8x8x32xf32> to vector<8x1x32xf32>
    %395 = vector.shape_cast %394 : vector<8x1x32xf32> to vector<8x32xf32>
    %396 = arith.truncf %395 : vector<8x32xf32> to vector<8x32xbf16>
    %c0_141 = arith.constant 0 : index
    %c0_142 = arith.constant 0 : index
    %397 = vector.load %arg8[%c0_141, %c0_142] : memref<32x128xbf16, #tpu.memory_space<vmem>>, vector<32x128xbf16>
    %cst_143 = arith.constant dense<0.000000e+00> : vector<8x128xf32>
    %398 = tpu.matmul %396, %397, %cst_143 {dimension_numbers = #tpu.dot_dimension_numbers<[1], [0], [0], [1], [0, 0, 1, 1], [], []>} : vector<8x32xbf16>, vector<32x128xbf16>, vector<8x128xf32> -> vector<8x128xf32>
    %c0_144 = arith.constant 0 : index
    %c0_145 = arith.constant 0 : index
    %399 = vector.load %arg9[%c0_144, %c0_145] : memref<1x128xf32, #tpu.memory_space<vmem>>, vector<1x128xf32>
    %400 = vector.broadcast %399 : vector<1x128xf32> to vector<8x128xf32>
    %401 = arith.addf %398, %400 : vector<8x128xf32>
    %c0_146 = arith.constant 0 : index
    %c0_147 = arith.constant 0 : index
    %402 = vector.load %arg10[%c0_146, %c0_147] : memref<8x128xf32, #tpu.memory_space<vmem>>, vector<8x128xf32>
    tpu.vector_store %arg10[%c0_146, %c0_147], %401 {strides = array<i32>} : memref<8x128xf32, #tpu.memory_space<vmem>>, vector<8x128xf32>,
    return
  }
  func.func @transform_0(%arg0: i32) -> (i32, i32) {
    %c0_i32 = arith.constant 0 : i32
    %c0_i32_0 = arith.constant 0 : i32
    %c0_i32_1 = arith.constant 0 : i32
    return %c0_i32, %c0_i32_0 : i32, i32
  }
  func.func @transform_1(%arg0: i32) -> (i32, i32) {
    %c0_i32 = arith.constant 0 : i32
    %c0_i32_0 = arith.constant 0 : i32
    %c0_i32_1 = arith.constant 0 : i32
    return %c0_i32, %c0_i32_0 : i32, i32
  }
  func.func @transform_2(%arg0: i32) -> (i32, i32) {
    %c0_i32 = arith.constant 0 : i32
    %c0_i32_0 = arith.constant 0 : i32
    %c0_i32_1 = arith.constant 0 : i32
    return %c0_i32, %c0_i32_0 : i32, i32
  }
  func.func @transform_3(%arg0: i32) -> (i32, i32) {
    %c0_i32 = arith.constant 0 : i32
    %c0_i32_0 = arith.constant 0 : i32
    %c0_i32_1 = arith.constant 0 : i32
    return %c0_i32, %c0_i32_0 : i32, i32
  }
  func.func @transform_4(%arg0: i32) -> (i32, i32) {
    %c0_i32 = arith.constant 0 : i32
    %c0_i32_0 = arith.constant 0 : i32
    %c0_i32_1 = arith.constant 0 : i32
    return %c0_i32, %c0_i32_0 : i32, i32
  }
  func.func @transform_5(%arg0: i32) -> (i32, i32) {
    %c0_i32 = arith.constant 0 : i32
    %c0_i32_0 = arith.constant 0 : i32
    %c0_i32_1 = arith.constant 0 : i32
    return %c0_i32, %c0_i32_0 : i32, i32
  }
  func.func @transform_6(%arg0: i32) -> (i32, i32) {
    %c0_i32 = arith.constant 0 : i32
    %c0_i32_0 = arith.constant 0 : i32
    %c0_i32_1 = arith.constant 0 : i32
    return %c0_i32, %c0_i32_0 : i32, i32
  }
  func.func @transform_7(%arg0: i32) -> (i32, i32) {
    %c0_i32 = arith.constant 0 : i32
    %c0_i32_0 = arith.constant 0 : i32
    %c0_i32_1 = arith.constant 0 : i32
    return %c0_i32, %c0_i32_0 : i32, i32
  }
  func.func @transform_8(%arg0: i32) -> (i32, i32) {
    %c0_i32 = arith.constant 0 : i32
    %c0_i32_0 = arith.constant 0 : i32
    %c0_i32_1 = arith.constant 0 : i32
    return %c0_i32, %c0_i32_0 : i32, i32
  }
  func.func @transform_9(%arg0: i32) -> (i32, i32) {
    %c0_i32 = arith.constant 0 : i32
    %c0_i32_0 = arith.constant 0 : i32
    %c0_i32_1 = arith.constant 0 : i32
    return %c0_i32, %c0_i32_0 : i32, i32
  }
}

</mosaic_0001>

<llo_original>
// kernel: tpu_custom_call.1
$region0: #{tpu_custom_call.1}
  #allocation0 [shape = 'u32[]', space=smem, size = 0x4, offset = 0x4, fixed_abs, tag = 'smem constant byte address 0x4 - core index']
  #allocation1 [shape = 'u32[72,128]{1,0:T(1,128)}', space=vmem, size = 0x9000, scoped, tag = 'internal scratch']
  #allocation2 [shape = 'f32[64,128]{1,0:T(8,128)}', space=vmem, size = 0x8000, scoped, tag = 'scratch operand']
  #allocation3 [shape = 'f32[8,8,32]{2,1,0:T(8,128)}', space=vmem, size = 0x8000, scoped, tag = 'scratch operand']
  %s0 = inlined_call_operand.vmem [shape: f32[64,16], index: 0, kind: input, shape index: {}]
  %s1 = inlined_call_operand.vmem [shape: bf16[16,128], index: 1, kind: input, shape index: {}]
  %s2 = inlined_call_operand.vmem [shape: bf16[32,128], index: 2, kind: input, shape index: {}]
  %s3 = inlined_call_operand.vmem [shape: f32[1,128], index: 3, kind: input, shape index: {}]
  %s4 = inlined_call_operand.vmem [shape: bf16[32,128], index: 4, kind: input, shape index: {}]
  %s5 = inlined_call_operand.vmem [shape: bf16[32,128], index: 5, kind: input, shape index: {}]
  %s6 = inlined_call_operand.vmem [shape: f32[1,128], index: 6, kind: input, shape index: {}]
  %s7 = inlined_call_operand.vmem [shape: bf16[32,128], index: 7, kind: input, shape index: {}]
  %s8 = inlined_call_operand.vmem [shape: f32[1,128], index: 8, kind: input, shape index: {}]
  %s9 = inlined_call_operand.hbm [shape: f32[8,128], index: 9, kind: output, shape index: {}]
  %s10 = sld [smem:[#allocation0]]
  $region46: #{tpu_custom_call.1} parent=0
    _
  %s12 = ssub.s32 1, %s10
  %s13 = scalar_select 0, %s12, %s10
  $region1: #{tpu_custom_call.1} parent=0
    #allocation4 [shape = 'u8[4096]{0}', space=vmem, size = 0x1000, scoped, tag = 'output window, operand 0, single buffered']
    #allocation5 [shape = 's32[1]{0}', space=sflag, size = 0x4, scoped, tag = 'scoped memory for tpu_custom_call.1']
    %14 = vsyncpa [#allocation5], 0
    // Predicated region
    $region2: #{tpu_custom_call.1} parent=1 // pred_check
      _
    $region3: #{tpu_custom_call.1} parent=1 // pred_check_branch
      %16 = sbr.rel (0) target = $region5
    $region4: #{tpu_custom_call.1} parent=1 // pred_region
      _
    $region5: #{tpu_custom_call.1} parent=1 // pred_fallthru
      _
    // Predicated region
    $region6: #{tpu_custom_call.1} parent=1 // pred_check
      _
    $region7: #{tpu_custom_call.1} parent=1 // pred_check_branch
      %18 = sbr.rel (0) target = $region9
    $region8: #{tpu_custom_call.1} parent=1 // pred_region
      _
    $region9: #{tpu_custom_call.1} parent=1 // pred_fallthru
      _
    // Predicated region
    $region10: #{tpu_custom_call.1} parent=1 // pred_check
      _
    $region11: #{tpu_custom_call.1} parent=1 // pred_check_branch
      %20 = sbr.rel (0) target = $region13
    $region12: #{tpu_custom_call.1} parent=1 // pred_region
      _
    $region13: #{tpu_custom_call.1} parent=1 // pred_fallthru
      _
    // Predicated region
    $region14: #{tpu_custom_call.1} parent=1 // pred_check
      _
    $region15: #{tpu_custom_call.1} parent=1 // pred_check_branch
      %22 = sbr.rel (0) target = $region17
    $region16: #{tpu_custom_call.1} parent=1 // pred_region
      _
    $region17: #{tpu_custom_call.1} parent=1 // pred_fallthru
      _
    // Predicated region
    $region18: #{tpu_custom_call.1} parent=1 // pred_check
      _
    $region19: #{tpu_custom_call.1} parent=1 // pred_check_branch
      %24 = sbr.rel (0) target = $region21
    $region20: #{tpu_custom_call.1} parent=1 // pred_region
      _
    $region21: #{tpu_custom_call.1} parent=1 // pred_fallthru
      _
    // Predicated region
    $region22: #{tpu_custom_call.1} parent=1 // pred_check
      _
    $region23: #{tpu_custom_call.1} parent=1 // pred_check_branch
      %26 = sbr.rel (0) target = $region25
    $region24: #{tpu_custom_call.1} parent=1 // pred_region
      _
    $region25: #{tpu_custom_call.1} parent=1 // pred_fallthru
      _
    // Predicated region
    $region26: #{tpu_custom_call.1} parent=1 // pred_check
      _
    $region27: #{tpu_custom_call.1} parent=1 // pred_check_branch
      %28 = sbr.rel (0) target = $region29
    $region28: #{tpu_custom_call.1} parent=1 // pred_region
      _
    $region29: #{tpu_custom_call.1} parent=1 // pred_fallthru
      _
    // Predicated region
    $region30: #{tpu_custom_call.1} parent=1 // pred_check
      _
    $region31: #{tpu_custom_call.1} parent=1 // pred_check_branch
      %30 = sbr.rel (0) target = $region33
    $region32: #{tpu_custom_call.1} parent=1 // pred_region
      _
    $region33: #{tpu_custom_call.1} parent=1 // pred_fallthru
      _
    // Predicated region
    $region34: #{tpu_custom_call.1} parent=1 // pred_check
      _
    $region35: #{tpu_custom_call.1} parent=1 // pred_check_branch
      %32 = sbr.rel (0) target = $region37
    $region36: #{tpu_custom_call.1} parent=1 // pred_region
      _
    $region37: #{tpu_custom_call.1} parent=1 // pred_fallthru
      _
    %v34 = vld [vmem:[%s0] sm:$0xff]
    %v35 = vld [vmem:[%s0 + $0x8] sm:$0xff]
    %v36 = vld [vmem:[%s0 + $0x10] sm:$0xff]
    %v37 = vld [vmem:[%s0 + $0x18] sm:$0xff]
    %v38 = vld [vmem:[%s0 + $0x20] sm:$0xff]
    %v39 = vld [vmem:[%s0 + $0x28] sm:$0xff]
    %v40 = vld [vmem:[%s0 + $0x30] sm:$0xff]
    %v41 = vld [vmem:[%s0 + $0x38] sm:$0xff]
    %v42 = vpack.c.bf16 %v35, %v34
    %v43 = vpack.c.bf16 %v37, %v36
    %v44 = vpack.c.bf16 %v39, %v38
    %v45 = vpack.c.bf16 %v41, %v40
    %v46 = vld [vmem:[%s1] sm:$0xf]
    %v47 = vld [vmem:[%s1 + $0x4] sm:$0xf]
    %v48 = vld [vmem:[%s3] sm:$0x1]
    %v50 = vperm.slane %v48, 0
    %v54 = vunpack.c.l.b16 %v46
    %v55 = vunpack.c.l.b16 %v47
    %v56 = vpack.c.b16 %v55, %v54
    %vm58 = vcmask 130048
    %v60 = vsel %vm58, %v42, 0
    %v63 = vsel %vm58, %v43, 0
    %v66 = vsel %vm58, %v44, 0
    %v69 = vsel %vm58, %v45, 0
    %71 = vmatpush.bf16.msra.mxu0 0
    %72 = vmatpush.bf16.msra.mxu0 0
    %73 = vmatpush.bf16.msra.mxu0 0
    %74 = vmatpush.bf16.msra.mxu0 0
    %75 = vmatpush.bf16.msra.mxu0 0
    %76 = vmatpush.bf16.msra.mxu0 0
    %77 = vmatpush.bf16.msra.mxu0 0
    %78 = vmatpush.bf16.msra.mxu0 %v56
    %79 = vmatmul.bf16.gmra.mxu0 %v60
    %v80 = vpop.f32.mrf.mxu0
    %v81 = vadd.f32 %v50, %v80
    %v82 = vpop.f32.mrf.mxu0
    %v83 = vadd.f32 %v50, %v82
    %84 = vmatmul.bf16.gmra.mxu0 %v63
    %v85 = vpop.f32.mrf.mxu0
    %v86 = vadd.f32 %v50, %v85
    %v87 = vpop.f32.mrf.mxu0
    %v88 = vadd.f32 %v50, %v87
    %89 = vmatmul.bf16.gmra.mxu0 %v66
    %v90 = vpop.f32.mrf.mxu0
    %v91 = vadd.f32 %v50, %v90
    %v92 = vpop.f32.mrf.mxu0
    %v93 = vadd.f32 %v50, %v92
    %94 = vmatmul.bf16.gmra.mxu0 %v69
    %v95 = vpop.f32.mrf.mxu0
    %v96 = vadd.f32 %v50, %v95
    %v97 = vpop.f32.mrf.mxu0
    %v98 = vadd.f32 %v50, %v97
    %99 = vdwg.mxu0
    %100 = vst [vmem:[#allocation2] sm:$0xff] %v81
    %101 = vst [vmem:[#allocation2 + $0x8] sm:$0xff] %v83
    %102 = vst [vmem:[#allocation2 + $0x10] sm:$0xff] %v86
    %103 = vst [vmem:[#allocation2 + $0x18] sm:$0xff] %v88
    %104 = vst [vmem:[#allocation2 + $0x20] sm:$0xff] %v91
    %105 = vst [vmem:[#allocation2 + $0x28] sm:$0xff] %v93
    %106 = vst [vmem:[#allocation2 + $0x30] sm:$0xff] %v96
    %107 = vst [vmem:[#allocation2 + $0x38] sm:$0xff] %v98
    %v108 = vld [vmem:[#allocation2] sm:$0xff]
    %v109 = vld [vmem:[%s2] sm:$0xf]
    %v110 = vld [vmem:[%s2 + $0x4] sm:$0xf]
    %v111 = vld [vmem:[%s2 + $0x8] sm:$0xf]
    %v112 = vld [vmem:[%s2 + $0xc] sm:$0xf]
    %v117 = vunpack.c.l.b16 %v109
    %v118 = vunpack.c.l.b16 %v110
    %v119 = vunpack.c.l.b16 %v111
    %v120 = vunpack.c.l.b16 %v112
    %v121 = vpack.c.b16 %v118, %v117
    %v122 = vpack.c.b16 %v120, %v119
    %vm125 = vcmask 261120
    %v127 = vsel %vm125, 0, 0
    %129 = vmatpush.bf16.msra.mxu0 0
    %130 = vmatpush.bf16.msra.mxu0 0
    %131 = vmatpush.bf16.msra.mxu0 0
    %132 = vmatpush.bf16.msra.mxu0 0
    %133 = vmatpush.bf16.msra.mxu0 0
    %134 = vmatpush.bf16.msra.mxu0 0
    %135 = vmatpush.bf16.msra.mxu0 %v122
    %136 = vmatpush.bf16.msra.mxu0 %v121
    %137 = vmatmul.bf16.gmra.mxu0 %v127
    %v138 = vpop.f32.mrf.mxu0
    %v139 = vadd.f32 0.0, %v138
    %v140 = vpop.f32.mrf.mxu0
    %141 = vdwg.mxu0
    %v142 = vadd.f32 %v108, %v139
    %v143 = vxor.u32 %v142, 2147483648
    %v144 = vmul.f32 %v143, 1.442695
    %v145 = vpow.pop %v144
    %v146 = vadd.f32 %v145, 1.0
    %v147 = vrcp.pop %v146
    %v148 = vmul.f32 %v146, %v147
    %v149 = vsub.f32 1.0, %v148
    %v150 = vmul.f32 %v147, %v149
    %v151 = vadd.f32 %v147, %v150
    %vm152 = vweird.f32 %v146
    %vm153 = vweird.f32 %v147
    %vm154 = vmor %vm152, %vm153
    %v155 = vsel %vm154, %v147, %v151
    %v156 = vand.u32 2147483647, %v146
    %vm157 = vcmp.eq.f32.partialorder %v156, 8.507059e+37
    %v158 = vand.u32 %v146, 2147483648
    %v159 = vor.u32 1.1754944e-38, %v158
    %v160 = vsel %vm157, %v159, %v155
    %v161 = vmul.f32 1.0, %v160
    %v162 = vtanh.pop %v142
    %v163 = vmul.f32 %v161, 0.0
    %165 = vrot.lane.b32.xlu0 %v162, 64
    %v166 = vpop.permute.xlu0 %165
    %v168 = vmul.f32 %v161, %v166
    %170 = vrot.lane.b32.xlu0 %v168, 32
    %v171 = vpop.permute.xlu0 %170
    %v173 = vadd.f32 %v163, %v171
    %v174 = vtanh.pop %v173
    %176 = vrot.lane.b32.xlu0 %v174, 64
    %v177 = vpop.permute.xlu0 %176
    %v179 = vmul.f32 %v161, %v177
    %v180 = vld [vmem:[#allocation2 + $0x8] sm:$0xff]
    %v181 = vpack.c.bf16 %v179, %v179
    %183 = vrot.lane.b32.xlu0 %v181, 32
    %v184 = vpop.permute.xlu0 %183
    %v186 = vsel %vm125, %v184, 0
    %188 = vmatpush.bf16.msra.mxu0 0
    %189 = vmatpush.bf16.msra.mxu0 0
    %190 = vmatpush.bf16.msra.mxu0 0
    %191 = vmatpush.bf16.msra.mxu0 0
    %192 = vmatpush.bf16.msra.mxu0 0
    %193 = vmatpush.bf16.msra.mxu0 0
    %194 = vmatpush.bf16.msra.mxu0 %v122
    %195 = vmatpush.bf16.msra.mxu0 %v121
    %196 = vmatmul.bf16.gmra.mxu0 %v186
    %v197 = vpop.f32.mrf.mxu0
    %v198 = vadd.f32 0.0, %v197
    %v199 = vpop.f32.mrf.mxu0
    %200 = vdwg.mxu0
    %v201 = vadd.f32 %v180, %v198
    %v202 = vxor.u32 %v201, 2147483648
    %v203 = vmul.f32 %v202, 1.442695
    %v204 = vpow.pop %v203
    %v205 = vadd.f32 %v204, 1.0
    %v206 = vrcp.pop %v205
    %v207 = vmul.f32 %v205, %v206
    %v208 = vsub.f32 1.0, %v207
    %v209 = vmul.f32 %v206, %v208
    %v210 = vadd.f32 %v206, %v209
    %vm211 = vweird.f32 %v205
    %vm212 = vweird.f32 %v206
    %vm213 = vmor %vm211, %vm212
    %v214 = vsel %vm213, %v206, %v210
    %v215 = vand.u32 2147483647, %v205
    %vm216 = vcmp.eq.f32.partialorder %v215, 8.507059e+37
    %v217 = vand.u32 %v205, 2147483648
    %v218 = vor.u32 1.1754944e-38, %v217
    %v219 = vsel %vm216, %v218, %v214
    %v220 = vmul.f32 1.0, %v219
    %v221 = vtanh.pop %v201
    %v222 = vmul.f32 %v220, %v173
    %224 = vrot.lane.b32.xlu0 %v221, 64
    %v225 = vpop.permute.xlu0 %224
    %v227 = vmul.f32 %v220, %v225
    %229 = vrot.lane.b32.xlu0 %v227, 32
    %v230 = vpop.permute.xlu0 %229
    %v232 = vadd.f32 %v222, %v230
    %v233 = vtanh.pop %v232
    %235 = vrot.lane.b32.xlu0 %v233, 64
    %v236 = vpop.permute.xlu0 %235
    %v238 = vmul.f32 %v220, %v236
    %v239 = vld [vmem:[%s4] sm:$0xf]
    %v240 = vld [vmem:[%s4 + $0x4] sm:$0xf]
    %v241 = vld [vmem:[%s4 + $0x8] sm:$0xf]
    %v242 = vld [vmem:[%s4 + $0xc] sm:$0xf]
    %v243 = vld [vmem:[%s6] sm:$0x1]
    %v245 = vperm.slane %v243, 0
    %v251 = vunpack.c.l.b16 %v239
    %v252 = vunpack.c.l.b16 %v240
    %v253 = vunpack.c.l.b16 %v241
    %v254 = vunpack.c.l.b16 %v242
    %v255 = vpack.c.b16 %v252, %v251
    %v256 = vpack.c.b16 %v254, %v253
    %259 = vmatpush.bf16.msra.mxu0 0
    %260 = vmatpush.bf16.msra.mxu0 0
    %261 = vmatpush.bf16.msra.mxu0 0
    %262 = vmatpush.bf16.msra.mxu0 0
    %263 = vmatpush.bf16.msra.mxu0 0
    %264 = vmatpush.bf16.msra.mxu0 0
    %265 = vmatpush.bf16.msra.mxu0 %v256
    %266 = vmatpush.bf16.msra.mxu0 %v255
    %267 = vmatmul.bf16.gmra.mxu0 %v186
    %v268 = vpop.f32.mrf.mxu0
    %v269 = vadd.f32 %v245, %v268
    %v270 = vpop.f32.mrf.mxu0
    %271 = vdwg.mxu0
    %v272 = vld [vmem:[%s5] sm:$0xf]
    %v273 = vld [vmem:[%s5 + $0x4] sm:$0xf]
    %v274 = vld [vmem:[%s5 + $0x8] sm:$0xf]
    %v275 = vld [vmem:[%s5 + $0xc] sm:$0xf]
    %v280 = vunpack.c.l.b16 %v272
    %v281 = vunpack.c.l.b16 %v273
    %v282 = vunpack.c.l.b16 %v274
    %v283 = vunpack.c.l.b16 %v275
    %v284 = vpack.c.b16 %v281, %v280
    %v285 = vpack.c.b16 %v283, %v282
    %288 = vmatpush.bf16.msra.mxu0 0
    %289 = vmatpush.bf16.msra.mxu0 0
    %290 = vmatpush.bf16.msra.mxu0 0
    %291 = vmatpush.bf16.msra.mxu0 0
    %292 = vmatpush.bf16.msra.mxu0 0
    %293 = vmatpush.bf16.msra.mxu0 0
    %294 = vmatpush.bf16.msra.mxu0 %v285
    %295 = vmatpush.bf16.msra.mxu0 %v284
    %296 = vmatmul.bf16.gmra.mxu0 %v127
    %v297 = vpop.f32.mrf.mxu0
    %v298 = vadd.f32 0.0, %v297
    %v299 = vpop.f32.mrf.mxu0
    %300 = vdwg.mxu0
    %v301 = vadd.f32 %v269, %v298
    %v302 = vxor.u32 %v301, 2147483648
    %v303 = vmul.f32 %v302, 1.442695
    %v304 = vpow.pop %v303
    %v305 = vadd.f32 %v304, 1.0
    %v306 = vrcp.pop %v305
    %v307 = vmul.f32 %v305, %v306
    %v308 = vsub.f32 1.0, %v307
    %v309 = vmul.f32 %v306, %v308
    %v310 = vadd.f32 %v306, %v309
    %vm311 = vweird.f32 %v305
    %vm312 = vweird.f32 %v306
    %vm313 = vmor %vm311, %vm312
    %v314 = vsel %vm313, %v306, %v310
    %v315 = vand.u32 2147483647, %v305
    %vm316 = vcmp.eq.f32.partialorder %v315, 8.507059e+37
    %v317 = vand.u32 %v305, 2147483648
    %v318 = vor.u32 1.1754944e-38, %v317
    %v319 = vsel %vm316, %v318, %v314
    %v320 = vmul.f32 1.0, %v319
    %v321 = vtanh.pop %v301
    %v322 = vmul.f32 %v320, 0.0
    %324 = vrot.lane.b32.xlu0 %v321, 64
    %v325 = vpop.permute.xlu0 %324
    %v327 = vmul.f32 %v320, %v325
    %329 = vrot.lane.b32.xlu0 %v327, 32
    %v330 = vpop.permute.xlu0 %329
    %v332 = vadd.f32 %v322, %v330
    %v333 = vtanh.pop %v332
    %335 = vrot.lane.b32.xlu0 %v333, 64
    %v336 = vpop.permute.xlu0 %335
    %v338 = vmul.f32 %v320, %v336
    %340 = vrot.lane.b32.xlu0 %v338, 32
    %v341 = vpop.permute.xlu0 %340
    %343 = vst.msk [vmem:[#allocation3] sm:$0xff] %vm125, %v341
    %v344 = vld [vmem:[#allocation2 + $0x10] sm:$0xff]
    %v345 = vpack.c.bf16 %v238, %v238
    %v346 = vld [vmem:[%s2] sm:$0xf]
    %v347 = vld [vmem:[%s2 + $0x4] sm:$0xf]
    %v348 = vld [vmem:[%s2 + $0x8] sm:$0xf]
    %v349 = vld [vmem:[%s2 + $0xc] sm:$0xf]
    %351 = vrot.lane.b32.xlu0 %v345, 32
    %v352 = vpop.permute.xlu0 %351
    %v357 = vunpack.c.l.b16 %v346
    %v358 = vunpack.c.l.b16 %v347
    %v359 = vunpack.c.l.b16 %v348
    %v360 = vunpack.c.l.b16 %v349
    %v361 = vpack.c.b16 %v358, %v357
    %v362 = vpack.c.b16 %v360, %v359
    %v366 = vsel %vm125, %v352, 0
    %368 = vmatpush.bf16.msra.mxu0 0
    %369 = vmatpush.bf16.msra.mxu0 0
    %370 = vmatpush.bf16.msra.mxu0 0
    %371 = vmatpush.bf16.msra.mxu0 0
    %372 = vmatpush.bf16.msra.mxu0 0
    %373 = vmatpush.bf16.msra.mxu0 0
    %374 = vmatpush.bf16.msra.mxu0 %v362
    %375 = vmatpush.bf16.msra.mxu0 %v361
    %376 = vmatmul.bf16.gmra.mxu0 %v366
    %v377 = vpop.f32.mrf.mxu0
    %v378 = vadd.f32 0.0, %v377
    %v379 = vpop.f32.mrf.mxu0
    %380 = vdwg.mxu0
    %v381 = vadd.f32 %v344, %v378
    %v382 = vxor.u32 %v381, 2147483648
    %v383 = vmul.f32 %v382, 1.442695
    %v384 = vpow.pop %v383
    %v385 = vadd.f32 %v384, 1.0
    %v386 = vrcp.pop %v385
    %v387 = vmul.f32 %v385, %v386
    %v388 = vsub.f32 1.0, %v387
    %v389 = vmul.f32 %v386, %v388
    %v390 = vadd.f32 %v386, %v389
    %vm391 = vweird.f32 %v385
    %vm392 = vweird.f32 %v386
    %vm393 = vmor %vm391, %vm392
    %v394 = vsel %vm393, %v386, %v390
    %v395 = vand.u32 2147483647, %v385
    %vm396 = vcmp.eq.f32.partialorder %v395, 8.507059e+37
    %v397 = vand.u32 %v385, 2147483648
    %v398 = vor.u32 1.1754944e-38, %v397
    %v399 = vsel %vm396, %v398, %v394
    %v400 = vmul.f32 1.0, %v399
    %v401 = vtanh.pop %v381
    %v402 = vmul.f32 %v400, %v232
    %404 = vrot.lane.b32.xlu0 %v401, 64
    %v405 = vpop.permute.xlu0 %404
    %v407 = vmul.f32 %v400, %v405
    %409 = vrot.lane.b32.xlu0 %v407, 32
    %v410 = vpop.permute.xlu0 %409
    %v412 = vadd.f32 %v402, %v410
    %v413 = vtanh.pop %v412
    %415 = vrot.lane.b32.xlu0 %v413, 64
    %v416 = vpop.permute.xlu0 %415
    %v418 = vmul.f32 %v400, %v416
    %v419 = vld [vmem:[%s4] sm:$0xf]
    %v420 = vld [vmem:[%s4 + $0x4] sm:$0xf]
    %v421 = vld [vmem:[%s4 + $0x8] sm:$0xf]
    %v422 = vld [vmem:[%s4 + $0xc] sm:$0xf]
    %v423 = vld [vmem:[%s6] sm:$0x1]
    %v425 = vperm.slane %v423, 0
    %v431 = vunpack.c.l.b16 %v419
    %v432 = vunpack.c.l.b16 %v420
    %v433 = vunpack.c.l.b16 %v421
    %v434 = vunpack.c.l.b16 %v422
    %v435 = vpack.c.b16 %v432, %v431
    %v436 = vpack.c.b16 %v434, %v433
    %439 = vmatpush.bf16.msra.mxu0 0
    %440 = vmatpush.bf16.msra.mxu0 0
    %441 = vmatpush.bf16.msra.mxu0 0
    %442 = vmatpush.bf16.msra.mxu0 0
    %443 = vmatpush.bf16.msra.mxu0 0
    %444 = vmatpush.bf16.msra.mxu0 0
    %445 = vmatpush.bf16.msra.mxu0 %v436
    %446 = vmatpush.bf16.msra.mxu0 %v435
    %447 = vmatmul.bf16.gmra.mxu0 %v366
    %v448 = vpop.f32.mrf.mxu0
    %v449 = vadd.f32 %v425, %v448
    %v450 = vpop.f32.mrf.mxu0
    %451 = vdwg.mxu0
    %v452 = vpack.c.bf16 %v338, %v338
    %v453 = vld [vmem:[%s5] sm:$0xf]
    %v454 = vld [vmem:[%s5 + $0x4] sm:$0xf]
    %v455 = vld [vmem:[%s5 + $0x8] sm:$0xf]
    %v456 = vld [vmem:[%s5 + $0xc] sm:$0xf]
    %458 = vrot.lane.b32.xlu0 %v452, 32
    %v459 = vpop.permute.xlu0 %458
    %v464 = vunpack.c.l.b16 %v453
    %v465 = vunpack.c.l.b16 %v454
    %v466 = vunpack.c.l.b16 %v455
    %v467 = vunpack.c.l.b16 %v456
    %v468 = vpack.c.b16 %v465, %v464
    %v469 = vpack.c.b16 %v467, %v466
    %v473 = vsel %vm125, %v459, 0
    %475 = vmatpush.bf16.msra.mxu0 0
    %476 = vmatpush.bf16.msra.mxu0 0
    %477 = vmatpush.bf16.msra.mxu0 0
    %478 = vmatpush.bf16.msra.mxu0 0
    %479 = vmatpush.bf16.msra.mxu0 0
    %480 = vmatpush.bf16.msra.mxu0 0
    %481 = vmatpush.bf16.msra.mxu0 %v469
    %482 = vmatpush.bf16.msra.mxu0 %v468
    %483 = vmatmul.bf16.gmra.mxu0 %v473
    %v484 = vpop.f32.mrf.mxu0
    %v485 = vadd.f32 0.0, %v484
    %v486 = vpop.f32.mrf.mxu0
    %487 = vdwg.mxu0
    %v488 = vadd.f32 %v449, %v485
    %v489 = vxor.u32 %v488, 2147483648
    %v490 = vmul.f32 %v489, 1.442695
    %v491 = vpow.pop %v490
    %v492 = vadd.f32 %v491, 1.0
    %v493 = vrcp.pop %v492
    %v494 = vmul.f32 %v492, %v493
    %v495 = vsub.f32 1.0, %v494
    %v496 = vmul.f32 %v493, %v495
    %v497 = vadd.f32 %v493, %v496
    %vm498 = vweird.f32 %v492
    %vm499 = vweird.f32 %v493
    %vm500 = vmor %vm498, %vm499
    %v501 = vsel %vm500, %v493, %v497
    %v502 = vand.u32 2147483647, %v492
    %vm503 = vcmp.eq.f32.partialorder %v502, 8.507059e+37
    %v504 = vand.u32 %v492, 2147483648
    %v505 = vor.u32 1.1754944e-38, %v504
    %v506 = vsel %vm503, %v505, %v501
    %v507 = vmul.f32 1.0, %v506
    %v508 = vtanh.pop %v488
    %v509 = vmul.f32 %v507, %v332
    %511 = vrot.lane.b32.xlu0 %v508, 64
    %v512 = vpop.permute.xlu0 %511
    %v514 = vmul.f32 %v507, %v512
    %516 = vrot.lane.b32.xlu0 %v514, 32
    %v517 = vpop.permute.xlu0 %516
    %v519 = vadd.f32 %v509, %v517
    %v520 = vtanh.pop %v519
    %522 = vrot.lane.b32.xlu0 %v520, 64
    %v523 = vpop.permute.xlu0 %522
    %v525 = vmul.f32 %v507, %v523
    %527 = vrot.lane.b32.xlu0 %v525, 32
    %v528 = vpop.permute.xlu0 %527
    %s530 = scalar_lea.vmem [#allocation3], 8
    %531 = vst.msk [vmem:[%s530] sm:$0xff] %vm125, %v528
    %v532 = vld [vmem:[#allocation2 + $0x18] sm:$0xff]
    %v533 = vpack.c.bf16 %v418, %v418
    %v534 = vld [vmem:[%s2] sm:$0xf]
    %v535 = vld [vmem:[%s2 + $0x4] sm:$0xf]
    %v536 = vld [vmem:[%s2 + $0x8] sm:$0xf]
    %v537 = vld [vmem:[%s2 + $0xc] sm:$0xf]
    %539 = vrot.lane.b32.xlu0 %v533, 32
    %v540 = vpop.permute.xlu0 %539
    %v545 = vunpack.c.l.b16 %v534
    %v546 = vunpack.c.l.b16 %v535
    %v547 = vunpack.c.l.b16 %v536
    %v548 = vunpack.c.l.b16 %v537
    %v549 = vpack.c.b16 %v546, %v545
    %v550 = vpack.c.b16 %v548, %v547
    %v554 = vsel %vm125, %v540, 0
    %556 = vmatpush.bf16.msra.mxu0 0
    %557 = vmatpush.bf16.msra.mxu0 0
    %558 = vmatpush.bf16.msra.mxu0 0
    %559 = vmatpush.bf16.msra.mxu0 0
    %560 = vmatpush.bf16.msra.mxu0 0
    %561 = vmatpush.bf16.msra.mxu0 0
    %562 = vmatpush.bf16.msra.mxu0 %v550
    %563 = vmatpush.bf16.msra.mxu0 %v549
    %564 = vmatmul.bf16.gmra.mxu0 %v554
    %v565 = vpop.f32.mrf.mxu0
    %v566 = vadd.f32 0.0, %v565
    %v567 = vpop.f32.mrf.mxu0
    %568 = vdwg.mxu0
    %v569 = vadd.f32 %v532, %v566
    %v570 = vxor.u32 %v569, 2147483648
    %v571 = vmul.f32 %v570, 1.442695
    %v572 = vpow.pop %v571
    %v573 = vadd.f32 %v572, 1.0
    %v574 = vrcp.pop %v573
    %v575 = vmul.f32 %v573, %v574
    %v576 = vsub.f32 1.0, %v575
    %v577 = vmul.f32 %v574, %v576
    %v578 = vadd.f32 %v574, %v577
    %vm579 = vweird.f32 %v573
    %vm580 = vweird.f32 %v574
    %vm581 = vmor %vm579, %vm580
    %v582 = vsel %vm581, %v574, %v578
    %v583 = vand.u32 2147483647, %v573
    %vm584 = vcmp.eq.f32.partialorder %v583, 8.507059e+37
    %v585 = vand.u32 %v573, 2147483648
    %v586 = vor.u32 1.1754944e-38, %v585
    %v587 = vsel %vm584, %v586, %v582
    %v588 = vmul.f32 1.0, %v587
    %v589 = vtanh.pop %v569
    %v590 = vmul.f32 %v588, %v412
    %592 = vrot.lane.b32.xlu0 %v589, 64
    %v593 = vpop.permute.xlu0 %592
    %v595 = vmul.f32 %v588, %v593
    %597 = vrot.lane.b32.xlu0 %v595, 32
    %v598 = vpop.permute.xlu0 %597
    %v600 = vadd.f32 %v590, %v598
    %v601 = vtanh.pop %v600
    %603 = vrot.lane.b32.xlu0 %v601, 64
    %v604 = vpop.permute.xlu0 %603
    %v606 = vmul.f32 %v588, %v604
    %v607 = vld [vmem:[%s4] sm:$0xf]
    %v608 = vld [vmem:[%s4 + $0x4] sm:$0xf]
    %v609 = vld [vmem:[%s4 + $0x8] sm:$0xf]
    %v610 = vld [vmem:[%s4 + $0xc] sm:$0xf]
    %v611 = vld [vmem:[%s6] sm:$0x1]
    %v613 = vperm.slane %v611, 0
    %v619 = vunpack.c.l.b16 %v607
    %v620 = vunpack.c.l.b16 %v608
    %v621 = vunpack.c.l.b16 %v609
    %v622 = vunpack.c.l.b16 %v610
    %v623 = vpack.c.b16 %v620, %v619
    %v624 = vpack.c.b16 %v622, %v621
    %627 = vmatpush.bf16.msra.mxu0 0
    %628 = vmatpush.bf16.msra.mxu0 0
    %629 = vmatpush.bf16.msra.mxu0 0
    %630 = vmatpush.bf16.msra.mxu0 0
    %631 = vmatpush.bf16.msra.mxu0 0
    %632 = vmatpush.bf16.msra.mxu0 0
    %633 = vmatpush.bf16.msra.mxu0 %v624
    %634 = vmatpush.bf16.msra.mxu0 %v623
    %635 = vmatmul.bf16.gmra.mxu0 %v554
    %v636 = vpop.f32.mrf.mxu0
    %v637 = vadd.f32 %v613, %v636
    %v638 = vpop.f32.mrf.mxu0
    %639 = vdwg.mxu0
    %v640 = vpack.c.bf16 %v525, %v525
    %v641 = vld [vmem:[%s5] sm:$0xf]
    %v642 = vld [vmem:[%s5 + $0x4] sm:$0xf]
    %v643 = vld [vmem:[%s5 + $0x8] sm:$0xf]
    %v644 = vld [vmem:[%s5 + $0xc] sm:$0xf]
    %646 = vrot.lane.b32.xlu0 %v640, 32
    %v647 = vpop.permute.xlu0 %646
    %v652 = vunpack.c.l.b16 %v641
    %v653 = vunpack.c.l.b16 %v642
    %v654 = vunpack.c.l.b16 %v643
    %v655 = vunpack.c.l.b16 %v644
    %v656 = vpack.c.b16 %v653, %v652
    %v657 = vpack.c.b16 %v655, %v654
    %v661 = vsel %vm125, %v647, 0
    %663 = vmatpush.bf16.msra.mxu0 0
    %664 = vmatpush.bf16.msra.mxu0 0
    %665 = vmatpush.bf16.msra.mxu0 0
    %666 = vmatpush.bf16.msra.mxu0 0
    %667 = vmatpush.bf16.msra.mxu0 0
    %668 = vmatpush.bf16.msra.mxu0 0
    %669 = vmatpush.bf16.msra.mxu0 %v657
    %670 = vmatpush.bf16.msra.mxu0 %v656
    %671 = vmatmul.bf16.gmra.mxu0 %v661
    %v672 = vpop.f32.mrf.mxu0
    %v673 = vadd.f32 0.0, %v672
    %v674 = vpop.f32.mrf.mxu0
    %675 = vdwg.mxu0
    %v676 = vadd.f32 %v637, %v673
    %v677 = vxor.u32 %v676, 2147483648
    %v678 = vmul.f32 %v677, 1.442695
    %v679 = vpow.pop %v678
    %v680 = vadd.f32 %v679, 1.0
    %v681 = vrcp.pop %v680
    %v682 = vmul.f32 %v680, %v681
    %v683 = vsub.f32 1.0, %v682
    %v684 = vmul.f32 %v681, %v683
    %v685 = vadd.f32 %v681, %v684
    %vm686 = vweird.f32 %v680
    %vm687 = vweird.f32 %v681
    %vm688 = vmor %vm686, %vm687
    %v689 = vsel %vm688, %v681, %v685
    %v690 = vand.u32 2147483647, %v680
    %vm691 = vcmp.eq.f32.partialorder %v690, 8.507059e+37
    %v692 = vand.u32 %v680, 2147483648
    %v693 = vor.u32 1.1754944e-38, %v692
    %v694 = vsel %vm691, %v693, %v689
    %v695 = vmul.f32 1.0, %v694
    %v696 = vtanh.pop %v676
    %v697 = vmul.f32 %v695, %v519
    %699 = vrot.lane.b32.xlu0 %v696, 64
    %v700 = vpop.permute.xlu0 %699
    %v702 = vmul.f32 %v695, %v700
    %704 = vrot.lane.b32.xlu0 %v702, 32
    %v705 = vpop.permute.xlu0 %704
    %v707 = vadd.f32 %v697, %v705
    %v708 = vtanh.pop %v707
    %710 = vrot.lane.b32.xlu0 %v708, 64
    %v711 = vpop.permute.xlu0 %710
    %v713 = vmul.f32 %v695, %v711
    %715 = vrot.lane.b32.xlu0 %v713, 32
    %v716 = vpop.permute.xlu0 %715
    %s718 = scalar_lea.vmem [#allocation3], 16
    %719 = vst.msk [vmem:[%s718] sm:$0xff] %vm125, %v716
    %v720 = vld [vmem:[#allocation2 + $0x20] sm:$0xff]
    %v721 = vpack.c.bf16 %v606, %v606
    %v722 = vld [vmem:[%s2] sm:$0xf]
    %v723 = vld [vmem:[%s2 + $0x4] sm:$0xf]
    %v724 = vld [vmem:[%s2 + $0x8] sm:$0xf]
    %v725 = vld [vmem:[%s2 + $0xc] sm:$0xf]
    %727 = vrot.lane.b32.xlu0 %v721, 32
    %v728 = vpop.permute.xlu0 %727
    %v733 = vunpack.c.l.b16 %v722
    %v734 = vunpack.c.l.b16 %v723
    %v735 = vunpack.c.l.b16 %v724
    %v736 = vunpack.c.l.b16 %v725
    %v737 = vpack.c.b16 %v734, %v733
    %v738 = vpack.c.b16 %v736, %v735
    %v742 = vsel %vm125, %v728, 0
    %744 = vmatpush.bf16.msra.mxu0 0
    %745 = vmatpush.bf16.msra.mxu0 0
    %746 = vmatpush.bf16.msra.mxu0 0
    %747 = vmatpush.bf16.msra.mxu0 0
    %748 = vmatpush.bf16.msra.mxu0 0
    %749 = vmatpush.bf16.msra.mxu0 0
    %750 = vmatpush.bf16.msra.mxu0 %v738
    %751 = vmatpush.bf16.msra.mxu0 %v737
    %752 = vmatmul.bf16.gmra.mxu0 %v742
    %v753 = vpop.f32.mrf.mxu0
    %v754 = vadd.f32 0.0, %v753
    %v755 = vpop.f32.mrf.mxu0
    %756 = vdwg.mxu0
    %v757 = vadd.f32 %v720, %v754
    %v758 = vxor.u32 %v757, 2147483648
    %v759 = vmul.f32 %v758, 1.442695
    %v760 = vpow.pop %v759
    %v761 = vadd.f32 %v760, 1.0
    %v762 = vrcp.pop %v761
    %v763 = vmul.f32 %v761, %v762
    %v764 = vsub.f32 1.0, %v763
    %v765 = vmul.f32 %v762, %v764
    %v766 = vadd.f32 %v762, %v765
    %vm767 = vweird.f32 %v761
    %vm768 = vweird.f32 %v762
    %vm769 = vmor %vm767, %vm768
    %v770 = vsel %vm769, %v762, %v766
    %v771 = vand.u32 2147483647, %v761
    %vm772 = vcmp.eq.f32.partialorder %v771, 8.507059e+37
    %v773 = vand.u32 %v761, 2147483648
    %v774 = vor.u32 1.1754944e-38, %v773
    %v775 = vsel %vm772, %v774, %v770
    %v776 = vmul.f32 1.0, %v775
    %v777 = vtanh.pop %v757
    %v778 = vmul.f32 %v776, %v600
    %780 = vrot.lane.b32.xlu0 %v777, 64
    %v781 = vpop.permute.xlu0 %780
    %v783 = vmul.f32 %v776, %v781
    %785 = vrot.lane.b32.xlu0 %v783, 32
    %v786 = vpop.permute.xlu0 %785
    %v788 = vadd.f32 %v778, %v786
    %v789 = vtanh.pop %v788
    %791 = vrot.lane.b32.xlu0 %v789, 64
    %v792 = vpop.permute.xlu0 %791
    %v794 = vmul.f32 %v776, %v792
    %v795 = vld [vmem:[%s4] sm:$0xf]
    %v796 = vld [vmem:[%s4 + $0x4] sm:$0xf]
    %v797 = vld [vmem:[%s4 + $0x8] sm:$0xf]
    %v798 = vld [vmem:[%s4 + $0xc] sm:$0xf]
    %v799 = vld [vmem:[%s6] sm:$0x1]
    %v801 = vperm.slane %v799, 0
    %v807 = vunpack.c.l.b16 %v795
    %v808 = vunpack.c.l.b16 %v796
    %v809 = vunpack.c.l.b16 %v797
    %v810 = vunpack.c.l.b16 %v798
    %v811 = vpack.c.b16 %v808, %v807
    %v812 = vpack.c.b16 %v810, %v809
    %815 = vmatpush.bf16.msra.mxu0 0
    %816 = vmatpush.bf16.msra.mxu0 0
    %817 = vmatpush.bf16.msra.mxu0 0
    %818 = vmatpush.bf16.msra.mxu0 0
    %819 = vmatpush.bf16.msra.mxu0 0
    %820 = vmatpush.bf16.msra.mxu0 0
    %821 = vmatpush.bf16.msra.mxu0 %v812
    %822 = vmatpush.bf16.msra.mxu0 %v811
    %823 = vmatmul.bf16.gmra.mxu0 %v742
    %v824 = vpop.f32.mrf.mxu0
    %v825 = vadd.f32 %v801, %v824
    %v826 = vpop.f32.mrf.mxu0
    %827 = vdwg.mxu0
    %v828 = vpack.c.bf16 %v713, %v713
    %v829 = vld [vmem:[%s5] sm:$0xf]
    %v830 = vld [vmem:[%s5 + $0x4] sm:$0xf]
    %v831 = vld [vmem:[%s5 + $0x8] sm:$0xf]
    %v832 = vld [vmem:[%s5 + $0xc] sm:$0xf]
    %834 = vrot.lane.b32.xlu0 %v828, 32
    %v835 = vpop.permute.xlu0 %834
    %v840 = vunpack.c.l.b16 %v829
    %v841 = vunpack.c.l.b16 %v830
    %v842 = vunpack.c.l.b16 %v831
    %v843 = vunpack.c.l.b16 %v832
    %v844 = vpack.c.b16 %v841, %v840
    %v845 = vpack.c.b16 %v843, %v842
    %v849 = vsel %vm125, %v835, 0
    %851 = vmatpush.bf16.msra.mxu0 0
    %852 = vmatpush.bf16.msra.mxu0 0
    %853 = vmatpush.bf16.msra.mxu0 0
    %854 = vmatpush.bf16.msra.mxu0 0
    %855 = vmatpush.bf16.msra.mxu0 0
    %856 = vmatpush.bf16.msra.mxu0 0
    %857 = vmatpush.bf16.msra.mxu0 %v845
    %858 = vmatpush.bf16.msra.mxu0 %v844
    %859 = vmatmul.bf16.gmra.mxu0 %v849
    %v860 = vpop.f32.mrf.mxu0
    %v861 = vadd.f32 0.0, %v860
    %v862 = vpop.f32.mrf.mxu0
    %863 = vdwg.mxu0
    %v864 = vadd.f32 %v825, %v861
    %v865 = vxor.u32 %v864, 2147483648
    %v866 = vmul.f32 %v865, 1.442695
    %v867 = vpow.pop %v866
    %v868 = vadd.f32 %v867, 1.0
    %v869 = vrcp.pop %v868
    %v870 = vmul.f32 %v868, %v869
    %v871 = vsub.f32 1.0, %v870
    %v872 = vmul.f32 %v869, %v871
    %v873 = vadd.f32 %v869, %v872
    %vm874 = vweird.f32 %v868
    %vm875 = vweird.f32 %v869
    %vm876 = vmor %vm874, %vm875
    %v877 = vsel %vm876, %v869, %v873
    %v878 = vand.u32 2147483647, %v868
    %vm879 = vcmp.eq.f32.partialorder %v878, 8.507059e+37
    %v880 = vand.u32 %v868, 2147483648
    %v881 = vor.u32 1.1754944e-38, %v880
    %v882 = vsel %vm879, %v881, %v877
    %v883 = vmul.f32 1.0, %v882
    %v884 = vtanh.pop %v864
    %v885 = vmul.f32 %v883, %v707
    %887 = vrot.lane.b32.xlu0 %v884, 64
    %v888 = vpop.permute.xlu0 %887
    %v890 = vmul.f32 %v883, %v888
    %892 = vrot.lane.b32.xlu0 %v890, 32
    %v893 = vpop.permute.xlu0 %892
    %v895 = vadd.f32 %v885, %v893
    %v896 = vtanh.pop %v895
    %898 = vrot.lane.b32.xlu0 %v896, 64
    %v899 = vpop.permute.xlu0 %898
    %v901 = vmul.f32 %v883, %v899
    %903 = vrot.lane.b32.xlu0 %v901, 32
    %v904 = vpop.permute.xlu0 %903
    %s906 = scalar_lea.vmem [#allocation3], 24
    %907 = vst.msk [vmem:[%s906] sm:$0xff] %vm125, %v904
    %v908 = vld [vmem:[#allocation2 + $0x28] sm:$0xff]
    %v909 = vpack.c.bf16 %v794, %v794
    %v910 = vld [vmem:[%s2] sm:$0xf]
    %v911 = vld [vmem:[%s2 + $0x4] sm:$0xf]
    %v912 = vld [vmem:[%s2 + $0x8] sm:$0xf]
    %v913 = vld [vmem:[%s2 + $0xc] sm:$0xf]
    %915 = vrot.lane.b32.xlu0 %v909, 32
    %v916 = vpop.permute.xlu0 %915
    %v921 = vunpack.c.l.b16 %v910
    %v922 = vunpack.c.l.b16 %v911
    %v923 = vunpack.c.l.b16 %v912
    %v924 = vunpack.c.l.b16 %v913
    %v925 = vpack.c.b16 %v922, %v921
    %v926 = vpack.c.b16 %v924, %v923
    %v930 = vsel %vm125, %v916, 0
    %932 = vmatpush.bf16.msra.mxu0 0
    %933 = vmatpush.bf16.msra.mxu0 0
    %934 = vmatpush.bf16.msra.mxu0 0
    %935 = vmatpush.bf16.msra.mxu0 0
    %936 = vmatpush.bf16.msra.mxu0 0
    %937 = vmatpush.bf16.msra.mxu0 0
    %938 = vmatpush.bf16.msra.mxu0 %v926
    %939 = vmatpush.bf16.msra.mxu0 %v925
    %940 = vmatmul.bf16.gmra.mxu0 %v930
    %v941 = vpop.f32.mrf.mxu0
    %v942 = vadd.f32 0.0, %v941
    %v943 = vpop.f32.mrf.mxu0
    %944 = vdwg.mxu0
    %v945 = vadd.f32 %v908, %v942
    %v946 = vxor.u32 %v945, 2147483648
    %v947 = vmul.f32 %v946, 1.442695
    %v948 = vpow.pop %v947
    %v949 = vadd.f32 %v948, 1.0
    %v950 = vrcp.pop %v949
    %v951 = vmul.f32 %v949, %v950
    %v952 = vsub.f32 1.0, %v951
    %v953 = vmul.f32 %v950, %v952
    %v954 = vadd.f32 %v950, %v953
    %vm955 = vweird.f32 %v949
    %vm956 = vweird.f32 %v950
    %vm957 = vmor %vm955, %vm956
    %v958 = vsel %vm957, %v950, %v954
    %v959 = vand.u32 2147483647, %v949
    %vm960 = vcmp.eq.f32.partialorder %v959, 8.507059e+37
    %v961 = vand.u32 %v949, 2147483648
    %v962 = vor.u32 1.1754944e-38, %v961
    %v963 = vsel %vm960, %v962, %v958
    %v964 = vmul.f32 1.0, %v963
    %v965 = vtanh.pop %v945
    %v966 = vmul.f32 %v964, %v788
    %968 = vrot.lane.b32.xlu0 %v965, 64
    %v969 = vpop.permute.xlu0 %968
    %v971 = vmul.f32 %v964, %v969
    %973 = vrot.lane.b32.xlu0 %v971, 32
    %v974 = vpop.permute.xlu0 %973
    %v976 = vadd.f32 %v966, %v974
    %v977 = vtanh.pop %v976
    %979 = vrot.lane.b32.xlu0 %v977, 64
    %v980 = vpop.permute.xlu0 %979
    %v982 = vmul.f32 %v964, %v980
    %v983 = vld [vmem:[%s4] sm:$0xf]
    %v984 = vld [vmem:[%s4 + $0x4] sm:$0xf]
    %v985 = vld [vmem:[%s4 + $0x8] sm:$0xf]
    %v986 = vld [vmem:[%s4 + $0xc] sm:$0xf]
    %v987 = vld [vmem:[%s6] sm:$0x1]
    %v989 = vperm.slane %v987, 0
    %v995 = vunpack.c.l.b16 %v983
    %v996 = vunpack.c.l.b16 %v984
    %v997 = vunpack.c.l.b16 %v985
    %v998 = vunpack.c.l.b16 %v986
    %v999 = vpack.c.b16 %v996, %v995
    %v1000 = vpack.c.b16 %v998, %v997
    %1003 = vmatpush.bf16.msra.mxu0 0
    %1004 = vmatpush.bf16.msra.mxu0 0
    %1005 = vmatpush.bf16.msra.mxu0 0
    %1006 = vmatpush.bf16.msra.mxu0 0
    %1007 = vmatpush.bf16.msra.mxu0 0
    %1008 = vmatpush.bf16.msra.mxu0 0
    %1009 = vmatpush.bf16.msra.mxu0 %v1000
    %1010 = vmatpush.bf16.msra.mxu0 %v999
    %1011 = vmatmul.bf16.gmra.mxu0 %v930
    %v1012 = vpop.f32.mrf.mxu0
    %v1013 = vadd.f32 %v989, %v1012
    %v1014 = vpop.f32.mrf.mxu0
    %1015 = vdwg.mxu0
    %v1016 = vpack.c.bf16 %v901, %v901
    %v1017 = vld [vmem:[%s5] sm:$0xf]
    %v1018 = vld [vmem:[%s5 + $0x4] sm:$0xf]
    %v1019 = vld [vmem:[%s5 + $0x8] sm:$0xf]
    %v1020 = vld [vmem:[%s5 + $0xc] sm:$0xf]
    %1022 = vrot.lane.b32.xlu0 %v1016, 32
    %v1023 = vpop.permute.xlu0 %1022
    %v1028 = vunpack.c.l.b16 %v1017
    %v1029 = vunpack.c.l.b16 %v1018
    %v1030 = vunpack.c.l.b16 %v1019
    %v1031 = vunpack.c.l.b16 %v1020
    %v1032 = vpack.c.b16 %v1029, %v1028
    %v1033 = vpack.c.b16 %v1031, %v1030
    %v1037 = vsel %vm125, %v1023, 0
    %1039 = vmatpush.bf16.msra.mxu0 0
    %1040 = vmatpush.bf16.msra.mxu0 0
    %1041 = vmatpush.bf16.msra.mxu0 0
    %1042 = vmatpush.bf16.msra.mxu0 0
    %1043 = vmatpush.bf16.msra.mxu0 0
    %1044 = vmatpush.bf16.msra.mxu0 0
    %1045 = vmatpush.bf16.msra.mxu0 %v1033
    %1046 = vmatpush.bf16.msra.mxu0 %v1032
    %1047 = vmatmul.bf16.gmra.mxu0 %v1037
    %v1048 = vpop.f32.mrf.mxu0
    %v1049 = vadd.f32 0.0, %v1048
    %v1050 = vpop.f32.mrf.mxu0
    %1051 = vdwg.mxu0
    %v1052 = vadd.f32 %v1013, %v1049
    %v1053 = vxor.u32 %v1052, 2147483648
    %v1054 = vmul.f32 %v1053, 1.442695
    %v1055 = vpow.pop %v1054
    %v1056 = vadd.f32 %v1055, 1.0
    %v1057 = vrcp.pop %v1056
    %v1058 = vmul.f32 %v1056, %v1057
    %v1059 = vsub.f32 1.0, %v1058
    %v1060 = vmul.f32 %v1057, %v1059
    %v1061 = vadd.f32 %v1057, %v1060
    %vm1062 = vweird.f32 %v1056
    %vm1063 = vweird.f32 %v1057
    %vm1064 = vmor %vm1062, %vm1063
    %v1065 = vsel %vm1064, %v1057, %v1061
    %v1066 = vand.u32 2147483647, %v1056
    %vm1067 = vcmp.eq.f32.partialorder %v1066, 8.507059e+37
    %v1068 = vand.u32 %v1056, 2147483648
    %v1069 = vor.u32 1.1754944e-38, %v1068
    %v1070 = vsel %vm1067, %v1069, %v1065
    %v1071 = vmul.f32 1.0, %v1070
    %v1072 = vtanh.pop %v1052
    %v1073 = vmul.f32 %v1071, %v895
    %1075 = vrot.lane.b32.xlu0 %v1072, 64
    %v1076 = vpop.permute.xlu0 %1075
    %v1078 = vmul.f32 %v1071, %v1076
    %1080 = vrot.lane.b32.xlu0 %v1078, 32
    %v1081 = vpop.permute.xlu0 %1080
    %v1083 = vadd.f32 %v1073, %v1081
    %v1084 = vtanh.pop %v1083
    %1086 = vrot.lane.b32.xlu0 %v1084, 64
    %v1087 = vpop.permute.xlu0 %1086
    %v1089 = vmul.f32 %v1071, %v1087
    %1091 = vrot.lane.b32.xlu0 %v1089, 32
    %v1092 = vpop.permute.xlu0 %1091
    %s1094 = scalar_lea.vmem [#allocation3], 32
    %1095 = vst.msk [vmem:[%s1094] sm:$0xff] %vm125, %v1092
    %v1096 = vld [vmem:[#allocation2 + $0x30] sm:$0xff]
    %v1097 = vpack.c.bf16 %v982, %v982
    %v1098 = vld [vmem:[%s2] sm:$0xf]
    %v1099 = vld [vmem:[%s2 + $0x4] sm:$0xf]
    %v1100 = vld [vmem:[%s2 + $0x8] sm:$0xf]
    %v1101 = vld [vmem:[%s2 + $0xc] sm:$0xf]
    %1103 = vrot.lane.b32.xlu0 %v1097, 32
    %v1104 = vpop.permute.xlu0 %1103
    %v1109 = vunpack.c.l.b16 %v1098
    %v1110 = vunpack.c.l.b16 %v1099
    %v1111 = vunpack.c.l.b16 %v1100
    %v1112 = vunpack.c.l.b16 %v1101
    %v1113 = vpack.c.b16 %v1110, %v1109
    %v1114 = vpack.c.b16 %v1112, %v1111
    %v1118 = vsel %vm125, %v1104, 0
    %1120 = vmatpush.bf16.msra.mxu0 0
    %1121 = vmatpush.bf16.msra.mxu0 0
    %1122 = vmatpush.bf16.msra.mxu0 0
    %1123 = vmatpush.bf16.msra.mxu0 0
    %1124 = vmatpush.bf16.msra.mxu0 0
    %1125 = vmatpush.bf16.msra.mxu0 0
    %1126 = vmatpush.bf16.msra.mxu0 %v1114
    %1127 = vmatpush.bf16.msra.mxu0 %v1113
    %1128 = vmatmul.bf16.gmra.mxu0 %v1118
    %v1129 = vpop.f32.mrf.mxu0
    %v1130 = vadd.f32 0.0, %v1129
    %v1131 = vpop.f32.mrf.mxu0
    %1132 = vdwg.mxu0
    %v1133 = vadd.f32 %v1096, %v1130
    %v1134 = vxor.u32 %v1133, 2147483648
    %v1135 = vmul.f32 %v1134, 1.442695
    %v1136 = vpow.pop %v1135
    %v1137 = vadd.f32 %v1136, 1.0
    %v1138 = vrcp.pop %v1137
    %v1139 = vmul.f32 %v1137, %v1138
    %v1140 = vsub.f32 1.0, %v1139
    %v1141 = vmul.f32 %v1138, %v1140
    %v1142 = vadd.f32 %v1138, %v1141
    %vm1143 = vweird.f32 %v1137
    %vm1144 = vweird.f32 %v1138
    %vm1145 = vmor %vm1143, %vm1144
    %v1146 = vsel %vm1145, %v1138, %v1142
    %v1147 = vand.u32 2147483647, %v1137
    %vm1148 = vcmp.eq.f32.partialorder %v1147, 8.507059e+37
    %v1149 = vand.u32 %v1137, 2147483648
    %v1150 = vor.u32 1.1754944e-38, %v1149
    %v1151 = vsel %vm1148, %v1150, %v1146
    %v1152 = vmul.f32 1.0, %v1151
    %v1153 = vtanh.pop %v1133
    %v1154 = vmul.f32 %v1152, %v976
    %1156 = vrot.lane.b32.xlu0 %v1153, 64
    %v1157 = vpop.permute.xlu0 %1156
    %v1159 = vmul.f32 %v1152, %v1157
    %1161 = vrot.lane.b32.xlu0 %v1159, 32
    %v1162 = vpop.permute.xlu0 %1161
    %v1164 = vadd.f32 %v1154, %v1162
    %v1165 = vtanh.pop %v1164
    %1167 = vrot.lane.b32.xlu0 %v1165, 64
    %v1168 = vpop.permute.xlu0 %1167
    %v1170 = vmul.f32 %v1152, %v1168
    %v1171 = vld [vmem:[%s4] sm:$0xf]
    %v1172 = vld [vmem:[%s4 + $0x4] sm:$0xf]
    %v1173 = vld [vmem:[%s4 + $0x8] sm:$0xf]
    %v1174 = vld [vmem:[%s4 + $0xc] sm:$0xf]
    %v1175 = vld [vmem:[%s6] sm:$0x1]
    %v1177 = vperm.slane %v1175, 0
    %v1183 = vunpack.c.l.b16 %v1171
    %v1184 = vunpack.c.l.b16 %v1172
    %v1185 = vunpack.c.l.b16 %v1173
    %v1186 = vunpack.c.l.b16 %v1174
    %v1187 = vpack.c.b16 %v1184, %v1183
    %v1188 = vpack.c.b16 %v1186, %v1185
    %1191 = vmatpush.bf16.msra.mxu0 0
    %1192 = vmatpush.bf16.msra.mxu0 0
    %1193 = vmatpush.bf16.msra.mxu0 0
    %1194 = vmatpush.bf16.msra.mxu0 0
    %1195 = vmatpush.bf16.msra.mxu0 0
    %1196 = vmatpush.bf16.msra.mxu0 0
    %1197 = vmatpush.bf16.msra.mxu0 %v1188
    %1198 = vmatpush.bf16.msra.mxu0 %v1187
    %1199 = vmatmul.bf16.gmra.mxu0 %v1118
    %v1200 = vpop.f32.mrf.mxu0
    %v1201 = vadd.f32 %v1177, %v1200
    %v1202 = vpop.f32.mrf.mxu0
    %1203 = vdwg.mxu0
    %v1204 = vpack.c.bf16 %v1089, %v1089
    %v1205 = vld [vmem:[%s5] sm:$0xf]
    %v1206 = vld [vmem:[%s5 + $0x4] sm:$0xf]
    %v1207 = vld [vmem:[%s5 + $0x8] sm:$0xf]
    %v1208 = vld [vmem:[%s5 + $0xc] sm:$0xf]
    %1210 = vrot.lane.b32.xlu0 %v1204, 32
    %v1211 = vpop.permute.xlu0 %1210
    %v1216 = vunpack.c.l.b16 %v1205
    %v1217 = vunpack.c.l.b16 %v1206
    %v1218 = vunpack.c.l.b16 %v1207
    %v1219 = vunpack.c.l.b16 %v1208
    %v1220 = vpack.c.b16 %v1217, %v1216
    %v1221 = vpack.c.b16 %v1219, %v1218
    %v1225 = vsel %vm125, %v1211, 0
    %1227 = vmatpush.bf16.msra.mxu0 0
    %1228 = vmatpush.bf16.msra.mxu0 0
    %1229 = vmatpush.bf16.msra.mxu0 0
    %1230 = vmatpush.bf16.msra.mxu0 0
    %1231 = vmatpush.bf16.msra.mxu0 0
    %1232 = vmatpush.bf16.msra.mxu0 0
    %1233 = vmatpush.bf16.msra.mxu0 %v1221
    %1234 = vmatpush.bf16.msra.mxu0 %v1220
    %1235 = vmatmul.bf16.gmra.mxu0 %v1225
    %v1236 = vpop.f32.mrf.mxu0
    %v1237 = vadd.f32 0.0, %v1236
    %v1238 = vpop.f32.mrf.mxu0
    %1239 = vdwg.mxu0
    %v1240 = vadd.f32 %v1201, %v1237
    %v1241 = vxor.u32 %v1240, 2147483648
    %v1242 = vmul.f32 %v1241, 1.442695
    %v1243 = vpow.pop %v1242
    %v1244 = vadd.f32 %v1243, 1.0
    %v1245 = vrcp.pop %v1244
    %v1246 = vmul.f32 %v1244, %v1245
    %v1247 = vsub.f32 1.0, %v1246
    %v1248 = vmul.f32 %v1245, %v1247
    %v1249 = vadd.f32 %v1245, %v1248
    %vm1250 = vweird.f32 %v1244
    %vm1251 = vweird.f32 %v1245
    %vm1252 = vmor %vm1250, %vm1251
    %v1253 = vsel %vm1252, %v1245, %v1249
    %v1254 = vand.u32 2147483647, %v1244
    %vm1255 = vcmp.eq.f32.partialorder %v1254, 8.507059e+37
    %v1256 = vand.u32 %v1244, 2147483648
    %v1257 = vor.u32 1.1754944e-38, %v1256
    %v1258 = vsel %vm1255, %v1257, %v1253
    %v1259 = vmul.f32 1.0, %v1258
    %v1260 = vtanh.pop %v1240
    %v1261 = vmul.f32 %v1259, %v1083
    %1263 = vrot.lane.b32.xlu0 %v1260, 64
    %v1264 = vpop.permute.xlu0 %1263
    %v1266 = vmul.f32 %v1259, %v1264
    %1268 = vrot.lane.b32.xlu0 %v1266, 32
    %v1269 = vpop.permute.xlu0 %1268
    %v1271 = vadd.f32 %v1261, %v1269
    %v1272 = vtanh.pop %v1271
    %1274 = vrot.lane.b32.xlu0 %v1272, 64
    %v1275 = vpop.permute.xlu0 %1274
    %v1277 = vmul.f32 %v1259, %v1275
    %1279 = vrot.lane.b32.xlu0 %v1277, 32
    %v1280 = vpop.permute.xlu0 %1279
    %s1282 = scalar_lea.vmem [#allocation3], 40
    %1283 = vst.msk [vmem:[%s1282] sm:$0xff] %vm125, %v1280
    %v1284 = vld [vmem:[#allocation2 + $0x38] sm:$0xff]
    %v1285 = vpack.c.bf16 %v1170, %v1170
    %v1286 = vld [vmem:[%s2] sm:$0xf]
    %v1287 = vld [vmem:[%s2 + $0x4] sm:$0xf]
    %v1288 = vld [vmem:[%s2 + $0x8] sm:$0xf]
    %v1289 = vld [vmem:[%s2 + $0xc] sm:$0xf]
    %1291 = vrot.lane.b32.xlu0 %v1285, 32
    %v1292 = vpop.permute.xlu0 %1291
    %v1297 = vunpack.c.l.b16 %v1286
    %v1298 = vunpack.c.l.b16 %v1287
    %v1299 = vunpack.c.l.b16 %v1288
    %v1300 = vunpack.c.l.b16 %v1289
    %v1301 = vpack.c.b16 %v1298, %v1297
    %v1302 = vpack.c.b16 %v1300, %v1299
    %v1306 = vsel %vm125, %v1292, 0
    %1308 = vmatpush.bf16.msra.mxu0 0
    %1309 = vmatpush.bf16.msra.mxu0 0
    %1310 = vmatpush.bf16.msra.mxu0 0
    %1311 = vmatpush.bf16.msra.mxu0 0
    %1312 = vmatpush.bf16.msra.mxu0 0
    %1313 = vmatpush.bf16.msra.mxu0 0
    %1314 = vmatpush.bf16.msra.mxu0 %v1302
    %1315 = vmatpush.bf16.msra.mxu0 %v1301
    %1316 = vmatmul.bf16.gmra.mxu0 %v1306
    %v1317 = vpop.f32.mrf.mxu0
    %v1318 = vadd.f32 0.0, %v1317
    %v1319 = vpop.f32.mrf.mxu0
    %1320 = vdwg.mxu0
    %v1321 = vadd.f32 %v1284, %v1318
    %v1322 = vxor.u32 %v1321, 2147483648
    %v1323 = vmul.f32 %v1322, 1.442695
    %v1324 = vpow.pop %v1323
    %v1325 = vadd.f32 %v1324, 1.0
    %v1326 = vrcp.pop %v1325
    %v1327 = vmul.f32 %v1325, %v1326
    %v1328 = vsub.f32 1.0, %v1327
    %v1329 = vmul.f32 %v1326, %v1328
    %v1330 = vadd.f32 %v1326, %v1329
    %vm1331 = vweird.f32 %v1325
    %vm1332 = vweird.f32 %v1326
    %vm1333 = vmor %vm1331, %vm1332
    %v1334 = vsel %vm1333, %v1326, %v1330
    %v1335 = vand.u32 2147483647, %v1325
    %vm1336 = vcmp.eq.f32.partialorder %v1335, 8.507059e+37
    %v1337 = vand.u32 %v1325, 2147483648
    %v1338 = vor.u32 1.1754944e-38, %v1337
    %v1339 = vsel %vm1336, %v1338, %v1334
    %v1340 = vmul.f32 1.0, %v1339
    %v1341 = vtanh.pop %v1321
    %v1342 = vmul.f32 %v1340, %v1164
    %1344 = vrot.lane.b32.xlu0 %v1341, 64
    %v1345 = vpop.permute.xlu0 %1344
    %v1347 = vmul.f32 %v1340, %v1345
    %1349 = vrot.lane.b32.xlu0 %v1347, 32
    %v1350 = vpop.permute.xlu0 %1349
    %v1352 = vadd.f32 %v1342, %v1350
    %v1353 = vtanh.pop %v1352
    %1355 = vrot.lane.b32.xlu0 %v1353, 64
    %v1356 = vpop.permute.xlu0 %1355
    %v1358 = vmul.f32 %v1340, %v1356
    %v1359 = vld [vmem:[%s4] sm:$0xf]
    %v1360 = vld [vmem:[%s4 + $0x4] sm:$0xf]
    %v1361 = vld [vmem:[%s4 + $0x8] sm:$0xf]
    %v1362 = vld [vmem:[%s4 + $0xc] sm:$0xf]
    %v1363 = vld [vmem:[%s6] sm:$0x1]
    %v1365 = vperm.slane %v1363, 0
    %v1371 = vunpack.c.l.b16 %v1359
    %v1372 = vunpack.c.l.b16 %v1360
    %v1373 = vunpack.c.l.b16 %v1361
    %v1374 = vunpack.c.l.b16 %v1362
    %v1375 = vpack.c.b16 %v1372, %v1371
    %v1376 = vpack.c.b16 %v1374, %v1373
    %1379 = vmatpush.bf16.msra.mxu0 0
    %1380 = vmatpush.bf16.msra.mxu0 0
    %1381 = vmatpush.bf16.msra.mxu0 0
    %1382 = vmatpush.bf16.msra.mxu0 0
    %1383 = vmatpush.bf16.msra.mxu0 0
    %1384 = vmatpush.bf16.msra.mxu0 0
    %1385 = vmatpush.bf16.msra.mxu0 %v1376
    %1386 = vmatpush.bf16.msra.mxu0 %v1375
    %1387 = vmatmul.bf16.gmra.mxu0 %v1306
    %v1388 = vpop.f32.mrf.mxu0
    %v1389 = vadd.f32 %v1365, %v1388
    %v1390 = vpop.f32.mrf.mxu0
    %1391 = vdwg.mxu0
    %v1392 = vpack.c.bf16 %v1277, %v1277
    %v1393 = vld [vmem:[%s5] sm:$0xf]
    %v1394 = vld [vmem:[%s5 + $0x4] sm:$0xf]
    %v1395 = vld [vmem:[%s5 + $0x8] sm:$0xf]
    %v1396 = vld [vmem:[%s5 + $0xc] sm:$0xf]
    %1398 = vrot.lane.b32.xlu0 %v1392, 32
    %v1399 = vpop.permute.xlu0 %1398
    %v1404 = vunpack.c.l.b16 %v1393
    %v1405 = vunpack.c.l.b16 %v1394
    %v1406 = vunpack.c.l.b16 %v1395
    %v1407 = vunpack.c.l.b16 %v1396
    %v1408 = vpack.c.b16 %v1405, %v1404
    %v1409 = vpack.c.b16 %v1407, %v1406
    %v1413 = vsel %vm125, %v1399, 0
    %1415 = vmatpush.bf16.msra.mxu0 0
    %1416 = vmatpush.bf16.msra.mxu0 0
    %1417 = vmatpush.bf16.msra.mxu0 0
    %1418 = vmatpush.bf16.msra.mxu0 0
    %1419 = vmatpush.bf16.msra.mxu0 0
    %1420 = vmatpush.bf16.msra.mxu0 0
    %1421 = vmatpush.bf16.msra.mxu0 %v1409
    %1422 = vmatpush.bf16.msra.mxu0 %v1408
    %1423 = vmatmul.bf16.gmra.mxu0 %v1413
    %v1424 = vpop.f32.mrf.mxu0
    %v1425 = vadd.f32 0.0, %v1424
    %v1426 = vpop.f32.mrf.mxu0
    %1427 = vdwg.mxu0
    %v1428 = vadd.f32 %v1389, %v1425
    %v1429 = vxor.u32 %v1428, 2147483648
    %v1430 = vmul.f32 %v1429, 1.442695
    %v1431 = vpow.pop %v1430
    %v1432 = vadd.f32 %v1431, 1.0
    %v1433 = vrcp.pop %v1432
    %v1434 = vmul.f32 %v1432, %v1433
    %v1435 = vsub.f32 1.0, %v1434
    %v1436 = vmul.f32 %v1433, %v1435
    %v1437 = vadd.f32 %v1433, %v1436
    %vm1438 = vweird.f32 %v1432
    %vm1439 = vweird.f32 %v1433
    %vm1440 = vmor %vm1438, %vm1439
    %v1441 = vsel %vm1440, %v1433, %v1437
    %v1442 = vand.u32 2147483647, %v1432
    %vm1443 = vcmp.eq.f32.partialorder %v1442, 8.507059e+37
    %v1444 = vand.u32 %v1432, 2147483648
    %v1445 = vor.u32 1.1754944e-38, %v1444
    %v1446 = vsel %vm1443, %v1445, %v1441
    %v1447 = vmul.f32 1.0, %v1446
    %v1448 = vtanh.pop %v1428
    %v1449 = vmul.f32 %v1447, %v1271
    %1451 = vrot.lane.b32.xlu0 %v1448, 64
    %v1452 = vpop.permute.xlu0 %1451
    %v1454 = vmul.f32 %v1447, %v1452
    %1456 = vrot.lane.b32.xlu0 %v1454, 32
    %v1457 = vpop.permute.xlu0 %1456
    %v1459 = vadd.f32 %v1449, %v1457
    %v1460 = vtanh.pop %v1459
    %1462 = vrot.lane.b32.xlu0 %v1460, 64
    %v1463 = vpop.permute.xlu0 %1462
    %v1465 = vmul.f32 %v1447, %v1463
    %1467 = vrot.lane.b32.xlu0 %v1465, 32
    %v1468 = vpop.permute.xlu0 %1467
    %s1470 = scalar_lea.vmem [#allocation3], 48
    %1471 = vst.msk [vmem:[%s1470] sm:$0xff] %vm125, %v1468
    %v1472 = vpack.c.bf16 %v1358, %v1358
    %v1473 = vld [vmem:[%s4] sm:$0xf]
    %v1474 = vld [vmem:[%s4 + $0x4] sm:$0xf]
    %v1475 = vld [vmem:[%s4 + $0x8] sm:$0xf]
    %v1476 = vld [vmem:[%s4 + $0xc] sm:$0xf]
    %v1477 = vld [vmem:[%s6] sm:$0x1]
    %v1479 = vperm.slane %v1477, 0
    %1482 = vrot.lane.b32.xlu0 %v1472, 32
    %v1483 = vpop.permute.xlu0 %1482
    %v1488 = vunpack.c.l.b16 %v1473
    %v1489 = vunpack.c.l.b16 %v1474
    %v1490 = vunpack.c.l.b16 %v1475
    %v1491 = vunpack.c.l.b16 %v1476
    %v1492 = vpack.c.b16 %v1489, %v1488
    %v1493 = vpack.c.b16 %v1491, %v1490
    %v1497 = vsel %vm125, %v1483, 0
    %1499 = vmatpush.bf16.msra.mxu0 0
    %1500 = vmatpush.bf16.msra.mxu0 0
    %1501 = vmatpush.bf16.msra.mxu0 0
    %1502 = vmatpush.bf16.msra.mxu0 0
    %1503 = vmatpush.bf16.msra.mxu0 0
    %1504 = vmatpush.bf16.msra.mxu0 0
    %1505 = vmatpush.bf16.msra.mxu0 %v1493
    %1506 = vmatpush.bf16.msra.mxu0 %v1492
    %1507 = vmatmul.bf16.gmra.mxu0 %v1497
    %v1508 = vpop.f32.mrf.mxu0
    %v1509 = vadd.f32 %v1479, %v1508
    %v1510 = vpop.f32.mrf.mxu0
    %1511 = vdwg.mxu0
    %v1512 = vpack.c.bf16 %v1465, %v1465
    %v1513 = vld [vmem:[%s5] sm:$0xf]
    %v1514 = vld [vmem:[%s5 + $0x4] sm:$0xf]
    %v1515 = vld [vmem:[%s5 + $0x8] sm:$0xf]
    %v1516 = vld [vmem:[%s5 + $0xc] sm:$0xf]
    %1518 = vrot.lane.b32.xlu0 %v1512, 32
    %v1519 = vpop.permute.xlu0 %1518
    %v1524 = vunpack.c.l.b16 %v1513
    %v1525 = vunpack.c.l.b16 %v1514
    %v1526 = vunpack.c.l.b16 %v1515
    %v1527 = vunpack.c.l.b16 %v1516
    %v1528 = vpack.c.b16 %v1525, %v1524
    %v1529 = vpack.c.b16 %v1527, %v1526
    %v1533 = vsel %vm125, %v1519, 0
    %1535 = vmatpush.bf16.msra.mxu0 0
    %1536 = vmatpush.bf16.msra.mxu0 0
    %1537 = vmatpush.bf16.msra.mxu0 0
    %1538 = vmatpush.bf16.msra.mxu0 0
    %1539 = vmatpush.bf16.msra.mxu0 0
    %1540 = vmatpush.bf16.msra.mxu0 0
    %1541 = vmatpush.bf16.msra.mxu0 %v1529
    %1542 = vmatpush.bf16.msra.mxu0 %v1528
    %1543 = vmatmul.bf16.gmra.mxu0 %v1533
    %v1544 = vpop.f32.mrf.mxu0
    %v1545 = vadd.f32 0.0, %v1544
    %v1546 = vpop.f32.mrf.mxu0
    %1547 = vdwg.mxu0
    %v1548 = vadd.f32 %v1509, %v1545
    %v1549 = vxor.u32 %v1548, 2147483648
    %v1550 = vmul.f32 %v1549, 1.442695
    %v1551 = vpow.pop %v1550
    %v1552 = vadd.f32 %v1551, 1.0
    %v1553 = vrcp.pop %v1552
    %v1554 = vmul.f32 %v1552, %v1553
    %v1555 = vsub.f32 1.0, %v1554
    %v1556 = vmul.f32 %v1553, %v1555
    %v1557 = vadd.f32 %v1553, %v1556
    %vm1558 = vweird.f32 %v1552
    %vm1559 = vweird.f32 %v1553
    %vm1560 = vmor %vm1558, %vm1559
    %v1561 = vsel %vm1560, %v1553, %v1557
    %v1562 = vand.u32 2147483647, %v1552
    %vm1563 = vcmp.eq.f32.partialorder %v1562, 8.507059e+37
    %v1564 = vand.u32 %v1552, 2147483648
    %v1565 = vor.u32 1.1754944e-38, %v1564
    %v1566 = vsel %vm1563, %v1565, %v1561
    %v1567 = vmul.f32 1.0, %v1566
    %v1568 = vtanh.pop %v1548
    %v1569 = vmul.f32 %v1567, %v1459
    %1571 = vrot.lane.b32.xlu0 %v1568, 64
    %v1572 = vpop.permute.xlu0 %1571
    %v1574 = vmul.f32 %v1567, %v1572
    %1576 = vrot.lane.b32.xlu0 %v1574, 32
    %v1577 = vpop.permute.xlu0 %1576
    %v1579 = vadd.f32 %v1569, %v1577
    %v1580 = vtanh.pop %v1579
    %1582 = vrot.lane.b32.xlu0 %v1580, 64
    %v1583 = vpop.permute.xlu0 %1582
    %v1585 = vmul.f32 %v1567, %v1583
    %1587 = vrot.lane.b32.xlu0 %v1585, 32
    %v1588 = vpop.permute.xlu0 %1587
    %s1590 = scalar_lea.vmem [#allocation3], 56
    %1591 = vst.msk [vmem:[%s1590] sm:$0xff] %vm125, %v1588
    %v1592 = vld [vmem:[#allocation3] sm:$0xff]
    %v1593 = vld [vmem:[#allocation3 + $0x8] sm:$0xff]
    %v1594 = vld [vmem:[#allocation3 + $0x10] sm:$0xff]
    %v1595 = vld [vmem:[#allocation3 + $0x18] sm:$0xff]
    %v1596 = vld [vmem:[#allocation3 + $0x20] sm:$0xff]
    %v1597 = vld [vmem:[#allocation3 + $0x28] sm:$0xff]
    %v1598 = vld [vmem:[#allocation3 + $0x30] sm:$0xff]
    %v1599 = vld [vmem:[#allocation3 + $0x38] sm:$0xff]
    %v1600 = vpack.c.bf16 %v1592, %v1592
    %v1601 = vpack.c.bf16 %v1593, %v1593
    %v1602 = vpack.c.bf16 %v1594, %v1594
    %v1603 = vpack.c.bf16 %v1595, %v1595
    %v1604 = vpack.c.bf16 %v1596, %v1596
    %v1605 = vpack.c.bf16 %v1597, %v1597
    %v1606 = vpack.c.bf16 %v1598, %v1598
    %v1607 = vpack.c.bf16 %v1599, %v1599
    %v1608 = vld [vmem:[%s7] sm:$0xf]
    %v1609 = vld [vmem:[%s7 + $0x4] sm:$0xf]
    %v1610 = vld [vmem:[%s7 + $0x8] sm:$0xf]
    %v1611 = vld [vmem:[%s7 + $0xc] sm:$0xf]
    %v1612 = vld [vmem:[%s8] sm:$0x1]
    %v1614 = vperm.slane %v1612, 0
    %v1624 = vunpack.c.l.b16 %v1600
    %v1625 = vunpack.c.l.b16 %v1601
    %v1626 = vunpack.c.l.b16 %v1602
    %v1627 = vunpack.c.l.b16 %v1603
    %v1628 = vunpack.c.l.b16 %v1604
    %v1629 = vunpack.c.l.b16 %v1605
    %v1630 = vunpack.c.l.b16 %v1606
    %v1631 = vunpack.c.l.b16 %v1607
    %v1632 = vrot.slane %v1624, 1
    %vm1633 = vcmask 1041409
    %v1634 = vsel %vm1633, %v1625, %v1632
    %v1635 = vrot.slane %v1626, 7
    %vm1636 = vcmask 1042434
    %v1637 = vsel %vm1636, %v1635, %v1634
    %v1638 = vrot.slane %v1627, 6
    %vm1639 = vcmask 1043459
    %v1640 = vsel %vm1639, %v1638, %v1637
    %v1641 = vrot.slane %v1628, 5
    %vm1642 = vcmask 1044484
    %v1643 = vsel %vm1642, %v1641, %v1640
    %v1644 = vrot.slane %v1629, 4
    %vm1645 = vcmask 1045509
    %v1646 = vsel %vm1645, %v1644, %v1643
    %v1647 = vrot.slane %v1630, 3
    %vm1648 = vcmask 1046534
    %v1649 = vsel %vm1648, %v1647, %v1646
    %v1650 = vrot.slane %v1631, 2
    %vm1651 = vcmask 1047559
    %v1652 = vsel %vm1651, %v1650, %v1649
    %v1653 = vpack.c.b16 %v1652, %v1652
    %v1658 = vunpack.c.l.b16 %v1608
    %v1659 = vunpack.c.l.b16 %v1609
    %v1660 = vunpack.c.l.b16 %v1610
    %v1661 = vunpack.c.l.b16 %v1611
    %v1662 = vpack.c.b16 %v1659, %v1658
    %v1663 = vpack.c.b16 %v1661, %v1660
    %v1667 = vsel %vm125, %v1653, 0
    %1669 = vmatpush.bf16.msra.mxu0 0
    %1670 = vmatpush.bf16.msra.mxu0 0
    %1671 = vmatpush.bf16.msra.mxu0 0
    %1672 = vmatpush.bf16.msra.mxu0 0
    %1673 = vmatpush.bf16.msra.mxu0 0
    %1674 = vmatpush.bf16.msra.mxu0 0
    %1675 = vmatpush.bf16.msra.mxu0 %v1663
    %1676 = vmatpush.bf16.msra.mxu0 %v1662
    %1677 = vmatmul.bf16.gmra.mxu0 %v1667
    %v1678 = vpop.f32.mrf.mxu0
    %v1679 = vadd.f32 %v1614, %v1678
    %v1680 = vpop.f32.mrf.mxu0
    %1681 = vdwg.mxu0
    %1682 = vst [vmem:[#allocation4] sm:$0xff] %v1679
    // Predicated region
    $region38: #{tpu_custom_call.1} parent=1 // pred_check
      _
    $region39: #{tpu_custom_call.1} parent=1 // pred_check_branch
      %1684 = sbr.rel (0) target = $region41
    $region40: #{tpu_custom_call.1} parent=1 // pred_region
      %1686 = vsyncadd [#allocation5], 0
      %s1688 = sshll.u32 [#allocation4], 4
      %s1689 = int_to_ptr.vmem [resolvable:$true] %s1688
      %s1690 = sshll.u32 %s9, 4
      %s1691 = int_to_ptr.hbm [resolvable:$true] %s1690
      %1693 = dma.vmem_to_hbm [thread:$0]  %s1689, 128, %s1691, [#allocation5]
    $region41: #{tpu_custom_call.1} parent=1 // pred_fallthru
      _
    // Predicated region
    $region42: #{tpu_custom_call.1} parent=1 // pred_check
      _
    $region43: #{tpu_custom_call.1} parent=1 // pred_check_branch
      %1695 = sbr.rel (0) target = $region45
    $region44: #{tpu_custom_call.1} parent=1 // pred_region
      %1697 = dma.done [#allocation5], 128
    $region45: #{tpu_custom_call.1} parent=1 // pred_fallthru
      _
    %1698 = vsyncpa [#allocation5], 1

</llo_original>
